<compile_context>
chip_gen: v7x
topology: tpu7x:2x2x1
jax: 0.10.0
libtpu: 0.0.40
codegen_flags: <defaults>
</compile_context>

<pallas_src>
import functools

import jax
import jax.numpy as jnp
from jax import lax
from jax.experimental import pallas as pl
from jax.experimental.pallas import tpu as pltpu


def _elu(x):
    # exp(min(x,0)) - 1 instead of expm1 to keep the lowering trivial.
    return jnp.where(x > 0.0, x, jnp.exp(jnp.minimum(x, 0.0)) - 1.0)


def _gat_body_kernel(adj_ref, x_ref, *refs, layer_cfgs, negative_slope):
    out_ref = refs[-1]
    param_refs = refs[:-1]

    neg_big = jnp.float32(-1e30)
    dn_last = (((1,), (1,)), ((), ()))   # contract both operands' last dims

    h = x_ref[...]                       # (N, Din) f32, lane-packed layer input
    ridx = 0
    for cfg in layer_cfgs:
        w_ref = param_refs[ridx]
        al_ref = param_refs[ridx + 1]    # (H, H*Dp) block-diagonal, f32
        ar_ref = param_refs[ridx + 2]    # (H*Dp, H) block-diagonal, f32
        ridx += 3
        rw_ref = None
        if cfg["res_kind"] == "proj":
            rw_ref = param_refs[ridx]
            ridx += 1

        heads = cfg["heads"]
        dp = cfg["dout_phys"]

        # adjacency mask, cheap bf16 compare (no resident f32 bias buffer)
        mask = adj_ref[...] > 0          # (N, N) bool, adj[dst, src]

        h_bf = h.astype(jnp.bfloat16)

        # --- ONE fused projection matmul for all heads (MXU, f32 accum) ---
        fh = jnp.dot(h_bf, w_ref[...],
                     preferred_element_type=jnp.float32)       # (N, H*Dp)
        fh_bf = fh.astype(jnp.bfloat16)

        # --- batched attention-vector contractions across heads ---
        er_all = jnp.dot(fh, ar_ref[...],
                         preferred_element_type=jnp.float32)   # (N, H) dst term
        el_all = lax.dot_general(al_ref[...], fh, dn_last,
                                 preferred_element_type=jnp.float32)  # (H, N) src term

        head_outs = []
        for hd in range(heads):
            er = er_all[:, hd:hd + 1]                          # (N, 1)
            el = el_all[hd:hd + 1, :]                          # (1, N) lane-major
            # e[dst, src] = leaky_relu(er[dst] + el[src]), masked by adjacency
            e = er + el
            e = jnp.where(e >= 0.0, e, negative_slope * e)
            e = jnp.where(mask, e, neg_big)

            # edge softmax over source nodes (incoming edges of each dst);
            # masked entries underflow to exactly 0, self-loops keep denom > 0.
            m = jnp.max(e, axis=-1, keepdims=True)
            p = jnp.exp(e - m)
            denom = jnp.sum(p, axis=-1, keepdims=True)

            fh_h = fh_bf[:, hd * dp:(hd + 1) * dp]             # (N, Dp)
            out_h = jnp.dot(p.astype(jnp.bfloat16), fh_h,
                            preferred_element_type=jnp.float32)
            # normalization folded after the aggregation matmul (exact recip).
            out_h = out_h * pl.reciprocal(denom)
            head_outs.append(out_h)

        out_all = head_outs[0] if heads == 1 else jnp.concatenate(head_outs,
                                                                  axis=-1)

        # residual: one batched add / one batched matmul per layer
        if cfg["res_kind"] == "identity":
            out_all = out_all + h
        elif cfg["res_kind"] == "proj":
            out_all = out_all + jnp.dot(h_bf, rw_ref[...],
                                        preferred_element_type=jnp.float32)

        if cfg["apply_elu"]:
            out_all = _elu(out_all)
        h = out_all                                            # (N, H*Dp)

    # final .mean(1) over heads (last layer's per-head blocks are 128-padded,
    # so the slices below are lane-tile aligned and the store is lane-dense).
    h_last = layer_cfgs[-1]["heads"]
    dp_last = layer_cfgs[-1]["dout_phys"]
    if h_last == 1:
        logits = h
    else:
        logits = h[:, :dp_last]
        for hd in range(1, h_last):
            logits = logits + h[:, hd * dp_last:(hd + 1) * dp_last]
        logits = logits * jnp.float32(1.0 / h_last)
    out_ref[...] = logits


# ----------------------------------------------------------------------------
# Parameter construction / packing (host-side glue)
# ----------------------------------------------------------------------------

def init_gat_body_params(key, num_layers, in_dim, num_hidden, heads, residual):
    """Deterministic (seeded) logical parameters matching DGL GATConv shapes."""
    cfgs = [dict(din=in_dim, heads=heads[0], residual=False, apply_elu=True)]
    for l in range(1, num_layers):
        cfgs.append(dict(din=num_hidden * heads[l - 1], heads=heads[l],
                         residual=residual, apply_elu=True))
    cfgs.append(dict(din=num_hidden * heads[-2], heads=heads[-1],
                     residual=residual, apply_elu=False))

    params = []
    for cfg in cfgs:
        din, hh = cfg["din"], cfg["heads"]
        key, k_w, k_al, k_ar, k_r = jax.random.split(key, 5)
        scale = (2.0 / (din + hh * num_hidden)) ** 0.5
        w = scale * jax.random.normal(k_w, (din, hh * num_hidden), jnp.float32)
        al = 0.1 * jax.random.normal(k_al, (hh, num_hidden), jnp.float32)
        ar = 0.1 * jax.random.normal(k_ar, (hh, num_hidden), jnp.float32)
        res_identity = (din == hh * num_hidden)
        res_w = None
        if cfg["residual"] and not res_identity:
            res_w = scale * jax.random.normal(k_r, (din, hh * num_hidden),
                                              jnp.float32)
        params.append(dict(cfg=cfg, w=w, al=al, ar=ar, res_w=res_w))
    return params


def _round_up(v, m):
    return ((v + m - 1) // m) * m


def pack_gat_body(params, in_dim, num_hidden, lane=128):
    """Repack logical params into lane-packed, bf16 / block-diagonal inputs."""
    arrays = []
    cfgs = []
    din = in_dim
    for li, p in enumerate(params):
        cfg = p["cfg"]
        hh = cfg["heads"]
        dout = num_hidden
        is_last = (li == len(params) - 1)
        dout_phys = _round_up(dout, lane) if is_last else dout
        assert din == cfg["din"]

        def pack_w(w2d, din=din, hh=hh, dout=dout, dout_phys=dout_phys):
            # logical (Din, H*Dout) -> physical (Din, H*Dout_phys), bf16
            w = w2d.reshape(din, hh, dout)
            if dout_phys != dout:
                w = jnp.pad(w, ((0, 0), (0, 0), (0, dout_phys - dout)))
            return w.reshape(din, hh * dout_phys).astype(jnp.bfloat16)

        arrays.append(pack_w(p["w"]))

        # block-diagonal attention vectors (built once, reused every call)
        al_bd = jnp.zeros((hh, hh * dout_phys), jnp.float32)
        ar_bd = jnp.zeros((hh * dout_phys, hh), jnp.float32)
        for hd in range(hh):
            s = hd * dout_phys
            al_bd = al_bd.at[hd, s:s + dout].set(p["al"][hd])
            ar_bd = ar_bd.at[s:s + dout, hd].set(p["ar"][hd])
        arrays += [al_bd, ar_bd]

        res_kind = "none"
        if cfg["residual"]:
            if p["res_w"] is not None:
                arrays.append(pack_w(p["res_w"]))
                res_kind = "proj"
            elif dout_phys != dout:
                # identity residual whose output blocks are padded:
                # materialize an explicit (padded) identity projection.
                arrays.append(pack_w(jnp.eye(din, hh * dout,
                                             dtype=jnp.float32)))
                res_kind = "proj"
            else:
                res_kind = "identity"

        cfgs.append(dict(heads=hh, dout_phys=dout_phys,
                         res_kind=res_kind, apply_elu=cfg["apply_elu"]))
        din = hh * dout_phys

    return dict(arrays=arrays, cfgs=tuple(cfgs),
                out_width=cfgs[-1]["dout_phys"])


# ----------------------------------------------------------------------------
# Forward wrapper
# ----------------------------------------------------------------------------

def _vmem_ceiling_bytes():
    """~75% of per-core VMEM (128 MiB v5e/v6e, 64 MiB v7x); safe fallback."""
    try:
        cap = int(pltpu.get_tpu_info().vmem_capacity_bytes)
        if cap > 0:
            return (cap * 3) // 4
    except Exception:
        pass
    return 48 * 1024 * 1024   # conservative: fits v7x's 64 MiB physical VMEM


def gat_body_forward(packed, adj_bf16, x, *, num_hidden, negative_slope):
    n = x.shape[0]
    out_w = packed["out_width"]
    inputs = [adj_bf16, x] + list(packed["arrays"])

    kernel = functools.partial(_gat_body_kernel,
                               layer_cfgs=packed["cfgs"],
                               negative_slope=negative_slope)

    # Size the scoped VMEM limit from the actual residency; fail loudly if the
    # fused whole-graph kernel can't fit on this chip generation.
    in_bytes = sum(int(a.size) * a.dtype.itemsize for a in inputs)
    out_bytes = n * out_w * 4
    max_width = max(c["heads"] * c["dout_phys"] for c in packed["cfgs"])
    layer_bytes = n * max_width * 20          # h, h_bf, fh, fh_bf, out/res (f32+bf16)
    scratch_bytes = 6 * n * n * 4 + layer_bytes   # live e/p temporaries + layer vals
    estimate = 2 * (in_bytes + out_bytes) + scratch_bytes
    ceiling = _vmem_ceiling_bytes()
    vmem_limit = int(max(estimate, 16 * 1024 * 1024))
    if vmem_limit > ceiling:
        raise ValueError(
            f"GAT_body fused kernel needs ~{vmem_limit} B VMEM but the "
            f"per-core ceiling is {ceiling} B; tile over destination rows "
            f"for graphs this large.")

    out = pl.pallas_call(
        kernel,
        out_shape=jax.ShapeDtypeStruct((n, out_w), jnp.float32),
        in_specs=[pl.BlockSpec(memory_space=pltpu.MemorySpace.VMEM)
                  for _ in inputs],
        out_specs=pl.BlockSpec(memory_space=pltpu.MemorySpace.VMEM),
        compiler_params=pltpu.CompilerParams(vmem_limit_bytes=vmem_limit),
    )(*inputs)
    return out[:, :num_hidden]               # drop lane padding (glue)


# ----------------------------------------------------------------------------
# Pure-JAX reference (f32) of the PyTorch/DGL GAT_body forward
# ----------------------------------------------------------------------------

def gat_body_reference(params, adj, x, negative_slope):
    h = x
    n_layers = len(params)
    for li, p in enumerate(params):
        cfg = p["cfg"]
        hh = cfg["heads"]
        dout = p["al"].shape[1]
        fh = (h @ p["w"]).reshape(-1, hh, dout)              # (N, H, D)
        el = jnp.einsum("nhd,hd->nh", fh, p["al"])           # source term
        er = jnp.einsum("nhd,hd->nh", fh, p["ar"])           # destination term
        e = er[:, None, :] + el[None, :, :]                  # (dst, src, H)
        e = jnp.where(e >= 0.0, e, negative_slope * e)
        e = jnp.where(adj[:, :, None] > 0, e, -1e30)
        alpha = jax.nn.softmax(e, axis=1)                    # softmax over src
        rst = jnp.einsum("dsh,shf->dhf", alpha, fh)          # (N, H, D)
        if cfg["residual"]:
            if p["res_w"] is not None:
                res = (h @ p["res_w"]).reshape(-1, hh, dout)
            else:
                res = h.reshape(h.shape[0], -1, dout)
            rst = rst + res
        if cfg["apply_elu"]:
            rst = jax.nn.elu(rst)
        if li < n_layers - 1:
            h = rst.reshape(rst.shape[0], hh * dout)         # .flatten(1)
        else:
            h = rst.mean(axis=1)                             # .mean(1)
    return h


if __name__ == "__main__":
    # Small, deterministic config consistent with GAT_body.__init__.
    num_layers = 2
    in_dim = 16
    num_hidden = 32
    heads = [2, 2, 1]          # len == num_layers + 1
    negative_slope = 0.2
    residual = True
    N = 64                     # number of graph nodes

    key = jax.random.PRNGKey(0)
    k_feat, k_adj, k_param = jax.random.split(key, 3)

    x = jax.random.normal(k_feat, (N, in_dim), jnp.float32)

    # Dense adjacency adj[dst, src] with self-loops so every node has >=1 edge.
    rand_adj = (jax.random.uniform(k_adj, (N, N)) < 0.15).astype(jnp.float32)
    adj = jnp.clip(rand_adj + jnp.eye(N, dtype=jnp.float32), 0.0, 1.0)

    params = init_gat_body_params(k_param, num_layers, in_dim, num_hidden,
                                  heads, residual)
    packed = pack_gat_body(params, in_dim, num_hidden)

    logits = gat_body_forward(packed, adj.astype(jnp.bfloat16), x,
                              num_hidden=num_hidden,
                              negative_slope=negative_slope)
    logits = jax.block_until_ready(logits)
    assert logits.shape == (N, num_hidden)
    assert bool(jnp.all(jnp.isfinite(logits)))

    # tolerance check vs. the f32 reference (kernel uses bf16 MXU operands)
    ref = gat_body_reference(params, adj, x, negative_slope)
    max_err = float(jnp.max(jnp.abs(logits - ref)))
    scale = float(jnp.max(jnp.abs(ref))) + 1e-6
    assert max_err <= 0.1 * scale, f"mismatch: max_err={max_err}, scale={scale}"

    print("KERNEL_OK")
</pallas_src>

<mosaic_0001>
module attributes {stable_mosaic.version = 11 : i64} {
  func.func @_gat_body_kernel(%arg0: memref<64x64xbf16, #tpu.memory_space<vmem>>, %arg1: memref<64x16xf32, #tpu.memory_space<vmem>>, %arg2: memref<16x64xbf16, #tpu.memory_space<vmem>>, %arg3: memref<2x64xf32, #tpu.memory_space<vmem>>, %arg4: memref<64x2xf32, #tpu.memory_space<vmem>>, %arg5: memref<64x64xbf16, #tpu.memory_space<vmem>>, %arg6: memref<2x64xf32, #tpu.memory_space<vmem>>, %arg7: memref<64x2xf32, #tpu.memory_space<vmem>>, %arg8: memref<64x128xbf16, #tpu.memory_space<vmem>>, %arg9: memref<1x128xf32, #tpu.memory_space<vmem>>, %arg10: memref<128x1xf32, #tpu.memory_space<vmem>>, %arg11: memref<64x128xbf16, #tpu.memory_space<vmem>>, %arg12: memref<64x128xf32, #tpu.memory_space<vmem>>) attributes {dimension_semantics = [], scalar_prefetch = 0 : i64, scratch_operands = 0 : i64, tpu.core_type = #tpu.core_type<tc>} {
    %c0 = arith.constant 0 : index
    %c0_0 = arith.constant 0 : index
    %0 = vector.load %arg1[%c0, %c0_0] : memref<64x16xf32, #tpu.memory_space<vmem>>, vector<64x16xf32>
    %c0_1 = arith.constant 0 : index
    %c0_2 = arith.constant 0 : index
    %1 = vector.load %arg0[%c0_1, %c0_2] : memref<64x64xbf16, #tpu.memory_space<vmem>>, vector<64x64xbf16>
    %cst = arith.constant 0.000000e+00 : bf16
    %2 = vector.broadcast %cst : bf16 to vector<64x64xbf16>
    %3 = arith.cmpf ogt, %1, %2 : vector<64x64xbf16>
    %4 = arith.truncf %0 : vector<64x16xf32> to vector<64x16xbf16>
    %c0_3 = arith.constant 0 : index
    %c0_4 = arith.constant 0 : index
    %5 = vector.load %arg2[%c0_3, %c0_4] : memref<16x64xbf16, #tpu.memory_space<vmem>>, vector<16x64xbf16>
    %cst_5 = arith.constant dense<0.000000e+00> : vector<64x64xf32>
    %6 = tpu.matmul %4, %5, %cst_5 {dimension_numbers = #tpu.dot_dimension_numbers<[1], [0], [0], [1], [0, 0, 1, 1], [], []>} : vector<64x16xbf16>, vector<16x64xbf16>, vector<64x64xf32> -> vector<64x64xf32>
    %7 = arith.truncf %6 : vector<64x64xf32> to vector<64x64xbf16>
    %c0_6 = arith.constant 0 : index
    %c0_7 = arith.constant 0 : index
    %8 = vector.load %arg4[%c0_6, %c0_7] : memref<64x2xf32, #tpu.memory_space<vmem>>, vector<64x2xf32>
    %cst_8 = arith.constant dense<0.000000e+00> : vector<64x2xf32>
    %9 = tpu.matmul %6, %8, %cst_8 {dimension_numbers = #tpu.dot_dimension_numbers<[1], [0], [0], [1], [0, 0, 1, 1], [], []>} : vector<64x64xf32>, vector<64x2xf32>, vector<64x2xf32> -> vector<64x2xf32>
    %c0_9 = arith.constant 0 : index
    %c0_10 = arith.constant 0 : index
    %10 = vector.load %arg3[%c0_9, %c0_10] : memref<2x64xf32, #tpu.memory_space<vmem>>, vector<2x64xf32>
    %cst_11 = arith.constant dense<0.000000e+00> : vector<2x64xf32>
    %11 = tpu.matmul %10, %6, %cst_11 {dimension_numbers = #tpu.dot_dimension_numbers<[1], [1], [0], [0], [0, 0, 1, 0], [], []>} : vector<2x64xf32>, vector<64x64xf32>, vector<2x64xf32> -> vector<2x64xf32>
    %12 = vector.extract_strided_slice %9 {offsets = [0, 0], sizes = [64, 1], strides = [1, 1]} : vector<64x2xf32> to vector<64x1xf32>
    %13 = vector.extract_strided_slice %11 {offsets = [0, 0], sizes = [1, 64], strides = [1, 1]} : vector<2x64xf32> to vector<1x64xf32>
    %14 = vector.broadcast %12 : vector<64x1xf32> to vector<64x64xf32>
    %15 = vector.broadcast %13 : vector<1x64xf32> to vector<64x64xf32>
    %16 = arith.addf %14, %15 : vector<64x64xf32>
    %cst_12 = arith.constant 0.000000e+00 : f32
    %17 = vector.broadcast %cst_12 : f32 to vector<64x64xf32>
    %18 = arith.cmpf oge, %16, %17 : vector<64x64xf32>
    %cst_13 = arith.constant 2.000000e-01 : f32
    %19 = vector.broadcast %cst_13 : f32 to vector<64x64xf32>
    %20 = arith.mulf %19, %16 : vector<64x64xf32>
    %21 = arith.select %18, %16, %20 : vector<64x64xi1>, vector<64x64xf32>
    %cst_14 = arith.constant -1.000000e+30 : f32
    %22 = vector.broadcast %cst_14 : f32 to vector<64x64xf32>
    %23 = arith.select %3, %21, %22 : vector<64x64xi1>, vector<64x64xf32>
    %cst_15 = arith.constant dense<0xFF800000> : vector<64xf32>
    %24 = vector.multi_reduction <maximumf>, %23, %cst_15 [1] : vector<64x64xf32> to vector<64xf32>
    %25 = vector.shape_cast %24 : vector<64xf32> to vector<64x1xf32>
    %26 = vector.broadcast %25 : vector<64x1xf32> to vector<64x64xf32>
    %27 = arith.subf %23, %26 : vector<64x64xf32>
    %28 = math.exp %27 : vector<64x64xf32>
    %cst_16 = arith.constant dense<0.000000e+00> : vector<64xf32>
    %29 = vector.multi_reduction <add>, %28, %cst_16 [1] : vector<64x64xf32> to vector<64xf32>
    %30 = vector.shape_cast %29 : vector<64xf32> to vector<64x1xf32>
    %31 = vector.extract_strided_slice %7 {offsets = [0, 0], sizes = [64, 32], strides = [1, 1]} : vector<64x64xbf16> to vector<64x32xbf16>
    %32 = arith.truncf %28 : vector<64x64xf32> to vector<64x64xbf16>
    %cst_17 = arith.constant dense<0.000000e+00> : vector<64x32xf32>
    %33 = tpu.matmul %32, %31, %cst_17 {dimension_numbers = #tpu.dot_dimension_numbers<[1], [0], [0], [1], [0, 0, 1, 1], [], []>} : vector<64x64xbf16>, vector<64x32xbf16>, vector<64x32xf32> -> vector<64x32xf32>
    %34 = tpu.reciprocal %30 : vector<64x1xf32> -> vector<64x1xf32>
    %35 = vector.broadcast %34 : vector<64x1xf32> to vector<64x32xf32>
    %36 = arith.mulf %33, %35 : vector<64x32xf32>
    %37 = vector.extract_strided_slice %9 {offsets = [0, 1], sizes = [64, 1], strides = [1, 1]} : vector<64x2xf32> to vector<64x1xf32>
    %38 = vector.extract_strided_slice %11 {offsets = [1, 0], sizes = [1, 64], strides = [1, 1]} : vector<2x64xf32> to vector<1x64xf32>
    %39 = vector.broadcast %37 : vector<64x1xf32> to vector<64x64xf32>
    %40 = vector.broadcast %38 : vector<1x64xf32> to vector<64x64xf32>
    %41 = arith.addf %39, %40 : vector<64x64xf32>
    %cst_18 = arith.constant 0.000000e+00 : f32
    %42 = vector.broadcast %cst_18 : f32 to vector<64x64xf32>
    %43 = arith.cmpf oge, %41, %42 : vector<64x64xf32>
    %cst_19 = arith.constant 2.000000e-01 : f32
    %44 = vector.broadcast %cst_19 : f32 to vector<64x64xf32>
    %45 = arith.mulf %44, %41 : vector<64x64xf32>
    %46 = arith.select %43, %41, %45 : vector<64x64xi1>, vector<64x64xf32>
    %cst_20 = arith.constant -1.000000e+30 : f32
    %47 = vector.broadcast %cst_20 : f32 to vector<64x64xf32>
    %48 = arith.select %3, %46, %47 : vector<64x64xi1>, vector<64x64xf32>
    %cst_21 = arith.constant dense<0xFF800000> : vector<64xf32>
    %49 = vector.multi_reduction <maximumf>, %48, %cst_21 [1] : vector<64x64xf32> to vector<64xf32>
    %50 = vector.shape_cast %49 : vector<64xf32> to vector<64x1xf32>
    %51 = vector.broadcast %50 : vector<64x1xf32> to vector<64x64xf32>
    %52 = arith.subf %48, %51 : vector<64x64xf32>
    %53 = math.exp %52 : vector<64x64xf32>
    %cst_22 = arith.constant dense<0.000000e+00> : vector<64xf32>
    %54 = vector.multi_reduction <add>, %53, %cst_22 [1] : vector<64x64xf32> to vector<64xf32>
    %55 = vector.shape_cast %54 : vector<64xf32> to vector<64x1xf32>
    %56 = vector.extract_strided_slice %7 {offsets = [0, 32], sizes = [64, 32], strides = [1, 1]} : vector<64x64xbf16> to vector<64x32xbf16>
    %57 = arith.truncf %53 : vector<64x64xf32> to vector<64x64xbf16>
    %cst_23 = arith.constant dense<0.000000e+00> : vector<64x32xf32>
    %58 = tpu.matmul %57, %56, %cst_23 {dimension_numbers = #tpu.dot_dimension_numbers<[1], [0], [0], [1], [0, 0, 1, 1], [], []>} : vector<64x64xbf16>, vector<64x32xbf16>, vector<64x32xf32> -> vector<64x32xf32>
    %59 = tpu.reciprocal %55 : vector<64x1xf32> -> vector<64x1xf32>
    %60 = vector.broadcast %59 : vector<64x1xf32> to vector<64x32xf32>
    %61 = arith.mulf %58, %60 : vector<64x32xf32>
    %62 = tpu.concatenate %36, %61 in 1 : vector<64x32xf32>, vector<64x32xf32> -> vector<64x64xf32>
    %cst_24 = arith.constant 0.000000e+00 : f32
    %63 = vector.broadcast %cst_24 : f32 to vector<64x64xf32>
    %64 = arith.cmpf ogt, %62, %63 : vector<64x64xf32>
    %cst_25 = arith.constant 0.000000e+00 : f32
    %65 = vector.broadcast %cst_25 : f32 to vector<64x64xf32>
    %66 = arith.minimumf %62, %65 : vector<64x64xf32>
    %67 = math.exp %66 : vector<64x64xf32>
    %cst_26 = arith.constant 1.000000e+00 : f32
    %68 = vector.broadcast %cst_26 : f32 to vector<64x64xf32>
    %69 = arith.subf %67, %68 : vector<64x64xf32>
    %70 = arith.select %64, %62, %69 : vector<64x64xi1>, vector<64x64xf32>
    %c0_27 = arith.constant 0 : index
    %c0_28 = arith.constant 0 : index
    %71 = vector.load %arg0[%c0_27, %c0_28] : memref<64x64xbf16, #tpu.memory_space<vmem>>, vector<64x64xbf16>
    %cst_29 = arith.constant 0.000000e+00 : bf16
    %72 = vector.broadcast %cst_29 : bf16 to vector<64x64xbf16>
    %73 = arith.cmpf ogt, %71, %72 : vector<64x64xbf16>
    %74 = arith.truncf %70 : vector<64x64xf32> to vector<64x64xbf16>
    %c0_30 = arith.constant 0 : index
    %c0_31 = arith.constant 0 : index
    %75 = vector.load %arg5[%c0_30, %c0_31] : memref<64x64xbf16, #tpu.memory_space<vmem>>, vector<64x64xbf16>
    %cst_32 = arith.constant dense<0.000000e+00> : vector<64x64xf32>
    %76 = tpu.matmul %74, %75, %cst_32 {dimension_numbers = #tpu.dot_dimension_numbers<[1], [0], [0], [1], [0, 0, 1, 1], [], []>} : vector<64x64xbf16>, vector<64x64xbf16>, vector<64x64xf32> -> vector<64x64xf32>
    %77 = arith.truncf %76 : vector<64x64xf32> to vector<64x64xbf16>
    %c0_33 = arith.constant 0 : index
    %c0_34 = arith.constant 0 : index
    %78 = vector.load %arg7[%c0_33, %c0_34] : memref<64x2xf32, #tpu.memory_space<vmem>>, vector<64x2xf32>
    %cst_35 = arith.constant dense<0.000000e+00> : vector<64x2xf32>
    %79 = tpu.matmul %76, %78, %cst_35 {dimension_numbers = #tpu.dot_dimension_numbers<[1], [0], [0], [1], [0, 0, 1, 1], [], []>} : vector<64x64xf32>, vector<64x2xf32>, vector<64x2xf32> -> vector<64x2xf32>
    %c0_36 = arith.constant 0 : index
    %c0_37 = arith.constant 0 : index
    %80 = vector.load %arg6[%c0_36, %c0_37] : memref<2x64xf32, #tpu.memory_space<vmem>>, vector<2x64xf32>
    %cst_38 = arith.constant dense<0.000000e+00> : vector<2x64xf32>
    %81 = tpu.matmul %80, %76, %cst_38 {dimension_numbers = #tpu.dot_dimension_numbers<[1], [1], [0], [0], [0, 0, 1, 0], [], []>} : vector<2x64xf32>, vector<64x64xf32>, vector<2x64xf32> -> vector<2x64xf32>
    %82 = vector.extract_strided_slice %79 {offsets = [0, 0], sizes = [64, 1], strides = [1, 1]} : vector<64x2xf32> to vector<64x1xf32>
    %83 = vector.extract_strided_slice %81 {offsets = [0, 0], sizes = [1, 64], strides = [1, 1]} : vector<2x64xf32> to vector<1x64xf32>
    %84 = vector.broadcast %82 : vector<64x1xf32> to vector<64x64xf32>
    %85 = vector.broadcast %83 : vector<1x64xf32> to vector<64x64xf32>
    %86 = arith.addf %84, %85 : vector<64x64xf32>
    %cst_39 = arith.constant 0.000000e+00 : f32
    %87 = vector.broadcast %cst_39 : f32 to vector<64x64xf32>
    %88 = arith.cmpf oge, %86, %87 : vector<64x64xf32>
    %cst_40 = arith.constant 2.000000e-01 : f32
    %89 = vector.broadcast %cst_40 : f32 to vector<64x64xf32>
    %90 = arith.mulf %89, %86 : vector<64x64xf32>
    %91 = arith.select %88, %86, %90 : vector<64x64xi1>, vector<64x64xf32>
    %cst_41 = arith.constant -1.000000e+30 : f32
    %92 = vector.broadcast %cst_41 : f32 to vector<64x64xf32>
    %93 = arith.select %73, %91, %92 : vector<64x64xi1>, vector<64x64xf32>
    %cst_42 = arith.constant dense<0xFF800000> : vector<64xf32>
    %94 = vector.multi_reduction <maximumf>, %93, %cst_42 [1] : vector<64x64xf32> to vector<64xf32>
    %95 = vector.shape_cast %94 : vector<64xf32> to vector<64x1xf32>
    %96 = vector.broadcast %95 : vector<64x1xf32> to vector<64x64xf32>
    %97 = arith.subf %93, %96 : vector<64x64xf32>
    %98 = math.exp %97 : vector<64x64xf32>
    %cst_43 = arith.constant dense<0.000000e+00> : vector<64xf32>
    %99 = vector.multi_reduction <add>, %98, %cst_43 [1] : vector<64x64xf32> to vector<64xf32>
    %100 = vector.shape_cast %99 : vector<64xf32> to vector<64x1xf32>
    %101 = vector.extract_strided_slice %77 {offsets = [0, 0], sizes = [64, 32], strides = [1, 1]} : vector<64x64xbf16> to vector<64x32xbf16>
    %102 = arith.truncf %98 : vector<64x64xf32> to vector<64x64xbf16>
    %cst_44 = arith.constant dense<0.000000e+00> : vector<64x32xf32>
    %103 = tpu.matmul %102, %101, %cst_44 {dimension_numbers = #tpu.dot_dimension_numbers<[1], [0], [0], [1], [0, 0, 1, 1], [], []>} : vector<64x64xbf16>, vector<64x32xbf16>, vector<64x32xf32> -> vector<64x32xf32>
    %104 = tpu.reciprocal %100 : vector<64x1xf32> -> vector<64x1xf32>
    %105 = vector.broadcast %104 : vector<64x1xf32> to vector<64x32xf32>
    %106 = arith.mulf %103, %105 : vector<64x32xf32>
    %107 = vector.extract_strided_slice %79 {offsets = [0, 1], sizes = [64, 1], strides = [1, 1]} : vector<64x2xf32> to vector<64x1xf32>
    %108 = vector.extract_strided_slice %81 {offsets = [1, 0], sizes = [1, 64], strides = [1, 1]} : vector<2x64xf32> to vector<1x64xf32>
    %109 = vector.broadcast %107 : vector<64x1xf32> to vector<64x64xf32>
    %110 = vector.broadcast %108 : vector<1x64xf32> to vector<64x64xf32>
    %111 = arith.addf %109, %110 : vector<64x64xf32>
    %cst_45 = arith.constant 0.000000e+00 : f32
    %112 = vector.broadcast %cst_45 : f32 to vector<64x64xf32>
    %113 = arith.cmpf oge, %111, %112 : vector<64x64xf32>
    %cst_46 = arith.constant 2.000000e-01 : f32
    %114 = vector.broadcast %cst_46 : f32 to vector<64x64xf32>
    %115 = arith.mulf %114, %111 : vector<64x64xf32>
    %116 = arith.select %113, %111, %115 : vector<64x64xi1>, vector<64x64xf32>
    %cst_47 = arith.constant -1.000000e+30 : f32
    %117 = vector.broadcast %cst_47 : f32 to vector<64x64xf32>
    %118 = arith.select %73, %116, %117 : vector<64x64xi1>, vector<64x64xf32>
    %cst_48 = arith.constant dense<0xFF800000> : vector<64xf32>
    %119 = vector.multi_reduction <maximumf>, %118, %cst_48 [1] : vector<64x64xf32> to vector<64xf32>
    %120 = vector.shape_cast %119 : vector<64xf32> to vector<64x1xf32>
    %121 = vector.broadcast %120 : vector<64x1xf32> to vector<64x64xf32>
    %122 = arith.subf %118, %121 : vector<64x64xf32>
    %123 = math.exp %122 : vector<64x64xf32>
    %cst_49 = arith.constant dense<0.000000e+00> : vector<64xf32>
    %124 = vector.multi_reduction <add>, %123, %cst_49 [1] : vector<64x64xf32> to vector<64xf32>
    %125 = vector.shape_cast %124 : vector<64xf32> to vector<64x1xf32>
    %126 = vector.extract_strided_slice %77 {offsets = [0, 32], sizes = [64, 32], strides = [1, 1]} : vector<64x64xbf16> to vector<64x32xbf16>
    %127 = arith.truncf %123 : vector<64x64xf32> to vector<64x64xbf16>
    %cst_50 = arith.constant dense<0.000000e+00> : vector<64x32xf32>
    %128 = tpu.matmul %127, %126, %cst_50 {dimension_numbers = #tpu.dot_dimension_numbers<[1], [0], [0], [1], [0, 0, 1, 1], [], []>} : vector<64x64xbf16>, vector<64x32xbf16>, vector<64x32xf32> -> vector<64x32xf32>
    %129 = tpu.reciprocal %125 : vector<64x1xf32> -> vector<64x1xf32>
    %130 = vector.broadcast %129 : vector<64x1xf32> to vector<64x32xf32>
    %131 = arith.mulf %128, %130 : vector<64x32xf32>
    %132 = tpu.concatenate %106, %131 in 1 : vector<64x32xf32>, vector<64x32xf32> -> vector<64x64xf32>
    %133 = arith.addf %132, %70 : vector<64x64xf32>
    %cst_51 = arith.constant 0.000000e+00 : f32
    %134 = vector.broadcast %cst_51 : f32 to vector<64x64xf32>
    %135 = arith.cmpf ogt, %133, %134 : vector<64x64xf32>
    %cst_52 = arith.constant 0.000000e+00 : f32
    %136 = vector.broadcast %cst_52 : f32 to vector<64x64xf32>
    %137 = arith.minimumf %133, %136 : vector<64x64xf32>
    %138 = math.exp %137 : vector<64x64xf32>
    %cst_53 = arith.constant 1.000000e+00 : f32
    %139 = vector.broadcast %cst_53 : f32 to vector<64x64xf32>
    %140 = arith.subf %138, %139 : vector<64x64xf32>
    %141 = arith.select %135, %133, %140 : vector<64x64xi1>, vector<64x64xf32>
    %c0_54 = arith.constant 0 : index
    %c0_55 = arith.constant 0 : index
    %142 = vector.load %arg0[%c0_54, %c0_55] : memref<64x64xbf16, #tpu.memory_space<vmem>>, vector<64x64xbf16>
    %cst_56 = arith.constant 0.000000e+00 : bf16
    %143 = vector.broadcast %cst_56 : bf16 to vector<64x64xbf16>
    %144 = arith.cmpf ogt, %142, %143 : vector<64x64xbf16>
    %145 = arith.truncf %141 : vector<64x64xf32> to vector<64x64xbf16>
    %c0_57 = arith.constant 0 : index
    %c0_58 = arith.constant 0 : index
    %146 = vector.load %arg8[%c0_57, %c0_58] : memref<64x128xbf16, #tpu.memory_space<vmem>>, vector<64x128xbf16>
    %cst_59 = arith.constant dense<0.000000e+00> : vector<64x128xf32>
    %147 = tpu.matmul %145, %146, %cst_59 {dimension_numbers = #tpu.dot_dimension_numbers<[1], [0], [0], [1], [0, 0, 1, 1], [], []>} : vector<64x64xbf16>, vector<64x128xbf16>, vector<64x128xf32> -> vector<64x128xf32>
    %148 = arith.truncf %147 : vector<64x128xf32> to vector<64x128xbf16>
    %c0_60 = arith.constant 0 : index
    %c0_61 = arith.constant 0 : index
    %149 = vector.load %arg10[%c0_60, %c0_61] : memref<128x1xf32, #tpu.memory_space<vmem>>, vector<128x1xf32>
    %cst_62 = arith.constant dense<0.000000e+00> : vector<64x1xf32>
    %150 = tpu.matmul %147, %149, %cst_62 {dimension_numbers = #tpu.dot_dimension_numbers<[1], [0], [0], [1], [0, 0, 1, 1], [], []>} : vector<64x128xf32>, vector<128x1xf32>, vector<64x1xf32> -> vector<64x1xf32>
    %c0_63 = arith.constant 0 : index
    %c0_64 = arith.constant 0 : index
    %151 = vector.load %arg9[%c0_63, %c0_64] : memref<1x128xf32, #tpu.memory_space<vmem>>, vector<1x128xf32>
    %cst_65 = arith.constant dense<0.000000e+00> : vector<1x64xf32>
    %152 = tpu.matmul %151, %147, %cst_65 {dimension_numbers = #tpu.dot_dimension_numbers<[1], [1], [0], [0], [0, 0, 1, 0], [], []>} : vector<1x128xf32>, vector<64x128xf32>, vector<1x64xf32> -> vector<1x64xf32>
    %153 = vector.broadcast %150 : vector<64x1xf32> to vector<64x64xf32>
    %154 = vector.broadcast %152 : vector<1x64xf32> to vector<64x64xf32>
    %155 = arith.addf %153, %154 : vector<64x64xf32>
    %cst_66 = arith.constant 0.000000e+00 : f32
    %156 = vector.broadcast %cst_66 : f32 to vector<64x64xf32>
    %157 = arith.cmpf oge, %155, %156 : vector<64x64xf32>
    %cst_67 = arith.constant 2.000000e-01 : f32
    %158 = vector.broadcast %cst_67 : f32 to vector<64x64xf32>
    %159 = arith.mulf %158, %155 : vector<64x64xf32>
    %160 = arith.select %157, %155, %159 : vector<64x64xi1>, vector<64x64xf32>
    %cst_68 = arith.constant -1.000000e+30 : f32
    %161 = vector.broadcast %cst_68 : f32 to vector<64x64xf32>
    %162 = arith.select %144, %160, %161 : vector<64x64xi1>, vector<64x64xf32>
    %cst_69 = arith.constant dense<0xFF800000> : vector<64xf32>
    %163 = vector.multi_reduction <maximumf>, %162, %cst_69 [1] : vector<64x64xf32> to vector<64xf32>
    %164 = vector.shape_cast %163 : vector<64xf32> to vector<64x1xf32>
    %165 = vector.broadcast %164 : vector<64x1xf32> to vector<64x64xf32>
    %166 = arith.subf %162, %165 : vector<64x64xf32>
    %167 = math.exp %166 : vector<64x64xf32>
    %cst_70 = arith.constant dense<0.000000e+00> : vector<64xf32>
    %168 = vector.multi_reduction <add>, %167, %cst_70 [1] : vector<64x64xf32> to vector<64xf32>
    %169 = vector.shape_cast %168 : vector<64xf32> to vector<64x1xf32>
    %170 = arith.truncf %167 : vector<64x64xf32> to vector<64x64xbf16>
    %cst_71 = arith.constant dense<0.000000e+00> : vector<64x128xf32>
    %171 = tpu.matmul %170, %148, %cst_71 {dimension_numbers = #tpu.dot_dimension_numbers<[1], [0], [0], [1], [0, 0, 1, 1], [], []>} : vector<64x64xbf16>, vector<64x128xbf16>, vector<64x128xf32> -> vector<64x128xf32>
    %172 = tpu.reciprocal %169 : vector<64x1xf32> -> vector<64x1xf32>
    %173 = vector.broadcast %172 : vector<64x1xf32> to vector<64x128xf32>
    %174 = arith.mulf %171, %173 : vector<64x128xf32>
    %c0_72 = arith.constant 0 : index
    %c0_73 = arith.constant 0 : index
    %175 = vector.load %arg11[%c0_72, %c0_73] : memref<64x128xbf16, #tpu.memory_space<vmem>>, vector<64x128xbf16>
    %cst_74 = arith.constant dense<0.000000e+00> : vector<64x128xf32>
    %176 = tpu.matmul %145, %175, %cst_74 {dimension_numbers = #tpu.dot_dimension_numbers<[1], [0], [0], [1], [0, 0, 1, 1], [], []>} : vector<64x64xbf16>, vector<64x128xbf16>, vector<64x128xf32> -> vector<64x128xf32>
    %177 = arith.addf %174, %176 : vector<64x128xf32>
    %c0_75 = arith.constant 0 : index
    %c0_76 = arith.constant 0 : index
    %178 = vector.load %arg12[%c0_75, %c0_76] : memref<64x128xf32, #tpu.memory_space<vmem>>, vector<64x128xf32>
    tpu.vector_store %arg12[%c0_75, %c0_76], %177 {strides = array<i32>} : memref<64x128xf32, #tpu.memory_space<vmem>>, vector<64x128xf32>,
    return
  }
}

</mosaic_0001>

<llo_original>
// kernel: tpu_custom_call.1
$region0: #{tpu_custom_call.1}
  #allocation0 [shape = 'u32[]', space=smem, size = 0x4, offset = 0x4, fixed_abs, tag = 'smem constant byte address 0x4 - core index']
  #allocation1 [shape = 'u32[144,128]{1,0:T(1,128)}', space=vmem, size = 0x12000, scoped, tag = 'internal scratch']
  %s0 = inlined_call_operand.vmem [shape: bf16[64,64], index: 0, kind: input, shape index: {}]
  %s1 = inlined_call_operand.vmem [shape: f32[64,16], index: 1, kind: input, shape index: {}]
  %s2 = inlined_call_operand.vmem [shape: bf16[16,64], index: 2, kind: input, shape index: {}]
  %s3 = inlined_call_operand.vmem [shape: f32[2,64], index: 3, kind: input, shape index: {}]
  %s4 = inlined_call_operand.vmem [shape: f32[64,2], index: 4, kind: input, shape index: {}]
  %s5 = inlined_call_operand.vmem [shape: bf16[64,64], index: 5, kind: input, shape index: {}]
  %s6 = inlined_call_operand.vmem [shape: f32[2,64], index: 6, kind: input, shape index: {}]
  %s7 = inlined_call_operand.vmem [shape: f32[64,2], index: 7, kind: input, shape index: {}]
  %s8 = inlined_call_operand.vmem [shape: bf16[64,128], index: 8, kind: input, shape index: {}]
  %s9 = inlined_call_operand.vmem [shape: f32[1,128], index: 9, kind: input, shape index: {}]
  %s10 = inlined_call_operand.vmem [shape: f32[128,1], index: 10, kind: input, shape index: {}]
  %s11 = inlined_call_operand.vmem [shape: bf16[64,128], index: 11, kind: input, shape index: {}]
  %s12 = inlined_call_operand.hbm [shape: f32[64,128], index: 12, kind: output, shape index: {}]
  %s13 = sld [smem:[#allocation0]]
  $region58: #{tpu_custom_call.1} parent=0
    _
  %s15 = ssub.s32 1, %s13
  %s16 = scalar_select 0, %s15, %s13
  $region1: #{tpu_custom_call.1} parent=0
    #allocation2 [shape = 'u8[32768]{0}', space=vmem, size = 0x8000, scoped, tag = 'output window, operand 0, single buffered']
    #allocation3 [shape = 's32[1]{0}', space=sflag, size = 0x4, scoped, tag = 'scoped memory for tpu_custom_call.1']
    %17 = vsyncpa [#allocation3], 0
    // Predicated region
    $region2: #{tpu_custom_call.1} parent=1 // pred_check
      _
    $region3: #{tpu_custom_call.1} parent=1 // pred_check_branch
      %19 = sbr.rel (0) target = $region5
    $region4: #{tpu_custom_call.1} parent=1 // pred_region
      _
    $region5: #{tpu_custom_call.1} parent=1 // pred_fallthru
      _
    // Predicated region
    $region6: #{tpu_custom_call.1} parent=1 // pred_check
      _
    $region7: #{tpu_custom_call.1} parent=1 // pred_check_branch
      %21 = sbr.rel (0) target = $region9
    $region8: #{tpu_custom_call.1} parent=1 // pred_region
      _
    $region9: #{tpu_custom_call.1} parent=1 // pred_fallthru
      _
    // Predicated region
    $region10: #{tpu_custom_call.1} parent=1 // pred_check
      _
    $region11: #{tpu_custom_call.1} parent=1 // pred_check_branch
      %23 = sbr.rel (0) target = $region13
    $region12: #{tpu_custom_call.1} parent=1 // pred_region
      _
    $region13: #{tpu_custom_call.1} parent=1 // pred_fallthru
      _
    // Predicated region
    $region14: #{tpu_custom_call.1} parent=1 // pred_check
      _
    $region15: #{tpu_custom_call.1} parent=1 // pred_check_branch
      %25 = sbr.rel (0) target = $region17
    $region16: #{tpu_custom_call.1} parent=1 // pred_region
      _
    $region17: #{tpu_custom_call.1} parent=1 // pred_fallthru
      _
    // Predicated region
    $region18: #{tpu_custom_call.1} parent=1 // pred_check
      _
    $region19: #{tpu_custom_call.1} parent=1 // pred_check_branch
      %27 = sbr.rel (0) target = $region21
    $region20: #{tpu_custom_call.1} parent=1 // pred_region
      _
    $region21: #{tpu_custom_call.1} parent=1 // pred_fallthru
      _
    // Predicated region
    $region22: #{tpu_custom_call.1} parent=1 // pred_check
      _
    $region23: #{tpu_custom_call.1} parent=1 // pred_check_branch
      %29 = sbr.rel (0) target = $region25
    $region24: #{tpu_custom_call.1} parent=1 // pred_region
      _
    $region25: #{tpu_custom_call.1} parent=1 // pred_fallthru
      _
    // Predicated region
    $region26: #{tpu_custom_call.1} parent=1 // pred_check
      _
    $region27: #{tpu_custom_call.1} parent=1 // pred_check_branch
      %31 = sbr.rel (0) target = $region29
    $region28: #{tpu_custom_call.1} parent=1 // pred_region
      _
    $region29: #{tpu_custom_call.1} parent=1 // pred_fallthru
      _
    // Predicated region
    $region30: #{tpu_custom_call.1} parent=1 // pred_check
      _
    $region31: #{tpu_custom_call.1} parent=1 // pred_check_branch
      %33 = sbr.rel (0) target = $region33
    $region32: #{tpu_custom_call.1} parent=1 // pred_region
      _
    $region33: #{tpu_custom_call.1} parent=1 // pred_fallthru
      _
    // Predicated region
    $region34: #{tpu_custom_call.1} parent=1 // pred_check
      _
    $region35: #{tpu_custom_call.1} parent=1 // pred_check_branch
      %35 = sbr.rel (0) target = $region37
    $region36: #{tpu_custom_call.1} parent=1 // pred_region
      _
    $region37: #{tpu_custom_call.1} parent=1 // pred_fallthru
      _
    // Predicated region
    $region38: #{tpu_custom_call.1} parent=1 // pred_check
      _
    $region39: #{tpu_custom_call.1} parent=1 // pred_check_branch
      %37 = sbr.rel (0) target = $region41
    $region40: #{tpu_custom_call.1} parent=1 // pred_region
      _
    $region41: #{tpu_custom_call.1} parent=1 // pred_fallthru
      _
    // Predicated region
    $region42: #{tpu_custom_call.1} parent=1 // pred_check
      _
    $region43: #{tpu_custom_call.1} parent=1 // pred_check_branch
      %39 = sbr.rel (0) target = $region45
    $region44: #{tpu_custom_call.1} parent=1 // pred_region
      _
    $region45: #{tpu_custom_call.1} parent=1 // pred_fallthru
      _
    // Predicated region
    $region46: #{tpu_custom_call.1} parent=1 // pred_check
      _
    $region47: #{tpu_custom_call.1} parent=1 // pred_check_branch
      %41 = sbr.rel (0) target = $region49
    $region48: #{tpu_custom_call.1} parent=1 // pred_region
      _
    $region49: #{tpu_custom_call.1} parent=1 // pred_fallthru
      _
    %v45 = vld [vmem:[%s1] sm:$0xff]
    %v46 = vld [vmem:[%s1 + $0x8] sm:$0xff]
    %v47 = vld [vmem:[%s1 + $0x10] sm:$0xff]
    %v48 = vld [vmem:[%s1 + $0x18] sm:$0xff]
    %v49 = vld [vmem:[%s1 + $0x20] sm:$0xff]
    %v50 = vld [vmem:[%s1 + $0x28] sm:$0xff]
    %v51 = vld [vmem:[%s1 + $0x30] sm:$0xff]
    %v52 = vld [vmem:[%s1 + $0x38] sm:$0xff]
    %v53 = vld [vmem:[%s0] sm:$0xf]
    %v54 = vld [vmem:[%s0 + $0x4] sm:$0xf]
    %v55 = vld [vmem:[%s0 + $0x8] sm:$0xf]
    %v56 = vld [vmem:[%s0 + $0xc] sm:$0xf]
    %v57 = vld [vmem:[%s0 + $0x10] sm:$0xf]
    %v58 = vld [vmem:[%s0 + $0x14] sm:$0xf]
    %v59 = vld [vmem:[%s0 + $0x18] sm:$0xf]
    %v60 = vld [vmem:[%s0 + $0x1c] sm:$0xf]
    %vm61 = vcmp.gt.bf16.partialorder %v53, 0
    %vm62 = vcmp.gt.bf16.partialorder %v54, 0
    %vm63 = vcmp.gt.bf16.partialorder %v55, 0
    %vm64 = vcmp.gt.bf16.partialorder %v56, 0
    %vm65 = vcmp.gt.bf16.partialorder %v57, 0
    %vm66 = vcmp.gt.bf16.partialorder %v58, 0
    %vm67 = vcmp.gt.bf16.partialorder %v59, 0
    %vm68 = vcmp.gt.bf16.partialorder %v60, 0
    %v69 = vpack.c.bf16 %v46, %v45
    %v70 = vpack.c.bf16 %v48, %v47
    %v71 = vpack.c.bf16 %v50, %v49
    %v72 = vpack.c.bf16 %v52, %v51
    %v73 = vld [vmem:[%s2] sm:$0xf]
    %v74 = vld [vmem:[%s2 + $0x4] sm:$0xf]
    %v77 = vunpack.c.l.b16 %v73
    %v78 = vunpack.c.l.b16 %v74
    %v79 = vpack.c.b16 %v78, %v77
    %vm81 = vcmask 130048
    %v83 = vsel %vm81, %v69, 0
    %v86 = vsel %vm81, %v70, 0
    %v89 = vsel %vm81, %v71, 0
    %v92 = vsel %vm81, %v72, 0
    %94 = vmatprep.subr.bf16.mxu0 0
    %95 = vmatpush1.bf16.msra.mxu0 %v79
    %96 = vmatprep.subr.bf16.mxu0 0
    %97 = vmatpush1.bf16.msra.mxu0 0
    %98 = vmatprep.subr.bf16.mxu0 0
    %99 = vmatpush1.bf16.msra.mxu0 0
    %100 = vmatprep.subr.bf16.mxu0 0
    %101 = vmatpush1.bf16.msra.mxu0 0
    %102 = vmatprep.subr.bf16.mxu0 0
    %103 = vmatpush1.bf16.msra.mxu0 0
    %104 = vmatprep.subr.bf16.mxu0 0
    %105 = vmatpush1.bf16.msra.mxu0 0
    %106 = vmatprep.subr.bf16.mxu0 0
    %107 = vmatpush1.bf16.msra.mxu0 0
    %108 = vmatprep.subr.bf16.mxu0 0
    %109 = vmatpush1.bf16.msra.mxu0 0
    %110 = vmatprep.subr.bf16.mxu0 0
    %111 = vmatpush1.bf16.msra.mxu0 0
    %112 = vmatprep.subr.bf16.mxu0 0
    %113 = vmatpush1.bf16.msra.mxu0 0
    %114 = vmatprep.subr.bf16.mxu0 0
    %115 = vmatpush1.bf16.msra.mxu0 0
    %116 = vmatprep.subr.bf16.mxu0 0
    %117 = vmatpush1.bf16.msra.mxu0 0
    %118 = vmatprep.subr.bf16.mxu0 0
    %119 = vmatpush1.bf16.msra.mxu0 0
    %120 = vmatprep.subr.bf16.mxu0 0
    %121 = vmatpush1.bf16.msra.mxu0 0
    %122 = vmatprep.subr.bf16.mxu0 0
    %123 = vmatpush1.bf16.msra.mxu0 0
    %124 = vmatprep.subr.bf16.mxu0 0
    %125 = vmatpush1.bf16.msra.mxu0 0
    %126 = vmatprep.mubr.bf16.mxu0 0
    %127 = vmatmul.mubr.bf16.gmra.mrb[0].mxu0 %v83
    %v128 = vpop.f32.mrb[0].mxu0
    %v129 = vadd.f32 0.0, %v128
    %v130 = vpop.f32.mrb[0].mxu0
    %v131 = vpop.f32.mrb[0].mxu0
    %v132 = vadd.f32 0.0, %v131
    %v133 = vpop.f32.mrb[0].mxu0
    %134 = vmatprep.mubr.bf16.mxu0 0
    %135 = vmatmul.mubr.bf16.gmra.mrb[0].mxu0 %v86
    %v136 = vpop.f32.mrb[0].mxu0
    %v137 = vadd.f32 0.0, %v136
    %v138 = vpop.f32.mrb[0].mxu0
    %v139 = vpop.f32.mrb[0].mxu0
    %v140 = vadd.f32 0.0, %v139
    %v141 = vpop.f32.mrb[0].mxu0
    %142 = vmatprep.mubr.bf16.mxu0 0
    %143 = vmatmul.mubr.bf16.gmra.mrb[0].mxu0 %v89
    %v144 = vpop.f32.mrb[0].mxu0
    %v145 = vadd.f32 0.0, %v144
    %v146 = vpop.f32.mrb[0].mxu0
    %v147 = vpop.f32.mrb[0].mxu0
    %v148 = vadd.f32 0.0, %v147
    %v149 = vpop.f32.mrb[0].mxu0
    %150 = vmatprep.mubr.bf16.mxu0 0
    %151 = vmatmul.mubr.bf16.gmra.mrb[0].mxu0 %v92
    %v152 = vpop.f32.mrb[0].mxu0
    %v153 = vadd.f32 0.0, %v152
    %v154 = vpop.f32.mrb[0].mxu0
    %v155 = vpop.f32.mrb[0].mxu0
    %v156 = vadd.f32 0.0, %v155
    %v157 = vpop.f32.mrb[0].mxu0
    %158 = vdwg.mxu0
    %v159 = vpack.c.bf16 %v132, %v129
    %v160 = vpack.c.bf16 %v140, %v137
    %v161 = vpack.c.bf16 %v148, %v145
    %v162 = vpack.c.bf16 %v156, %v153
    %v163 = vld [vmem:[%s4] sm:$0xff]
    %v164 = vld [vmem:[%s4 + $0x8] sm:$0xff]
    %v165 = vld [vmem:[%s4 + $0x10] sm:$0xff]
    %v166 = vld [vmem:[%s4 + $0x18] sm:$0xff]
    %v167 = vld [vmem:[%s4 + $0x20] sm:$0xff]
    %v168 = vld [vmem:[%s4 + $0x28] sm:$0xff]
    %v169 = vld [vmem:[%s4 + $0x30] sm:$0xff]
    %v170 = vld [vmem:[%s4 + $0x38] sm:$0xff]
    %vm171 = vcmask 523264
    %v173 = vsel %vm171, %v129, 0
    %v176 = vsel %vm171, %v132, 0
    %v179 = vsel %vm171, %v137, 0
    %v182 = vsel %vm171, %v140, 0
    %v185 = vsel %vm171, %v145, 0
    %v188 = vsel %vm171, %v148, 0
    %v191 = vsel %vm171, %v153, 0
    %v194 = vsel %vm171, %v156, 0
    %196 = vmatprep.subr.mxu0 0.0
    %197 = vmatpush1.msra.mxu0 %v163
    %198 = vmatprep.subr.mxu0 0.0
    %199 = vmatpush1.msra.mxu0 %v164
    %200 = vmatprep.subr.mxu0 0.0
    %201 = vmatpush1.msra.mxu0 %v165
    %202 = vmatprep.subr.mxu0 0.0
    %203 = vmatpush1.msra.mxu0 %v166
    %204 = vmatprep.subr.mxu0 0.0
    %205 = vmatpush1.msra.mxu0 %v167
    %206 = vmatprep.subr.mxu0 0.0
    %207 = vmatpush1.msra.mxu0 %v168
    %208 = vmatprep.subr.mxu0 0.0
    %209 = vmatpush1.msra.mxu0 %v169
    %210 = vmatprep.subr.mxu0 0.0
    %211 = vmatpush1.msra.mxu0 %v170
    %212 = vmatprep.subr.mxu0 0.0
    %213 = vmatpush1.msra.mxu0 0.0
    %214 = vmatprep.subr.mxu0 0.0
    %215 = vmatpush1.msra.mxu0 0.0
    %216 = vmatprep.subr.mxu0 0.0
    %217 = vmatpush1.msra.mxu0 0.0
    %218 = vmatprep.subr.mxu0 0.0
    %219 = vmatpush1.msra.mxu0 0.0
    %220 = vmatprep.subr.mxu0 0.0
    %221 = vmatpush1.msra.mxu0 0.0
    %222 = vmatprep.subr.mxu0 0.0
    %223 = vmatpush1.msra.mxu0 0.0
    %224 = vmatprep.subr.mxu0 0.0
    %225 = vmatpush1.msra.mxu0 0.0
    %226 = vmatprep.subr.mxu0 0.0
    %227 = vmatpush1.msra.mxu0 0.0
    %228 = vmatprep.subr.mxu0 0.0
    %229 = vmatpush1.msra.mxu0 0.0
    %230 = vmatprep.subr.mxu0 0.0
    %231 = vmatpush1.msra.mxu0 0.0
    %232 = vmatprep.subr.mxu0 0.0
    %233 = vmatpush1.msra.mxu0 0.0
    %234 = vmatprep.subr.mxu0 0.0
    %235 = vmatpush1.msra.mxu0 0.0
    %236 = vmatprep.subr.mxu0 0.0
    %237 = vmatpush1.msra.mxu0 0.0
    %238 = vmatprep.subr.mxu0 0.0
    %239 = vmatpush1.msra.mxu0 0.0
    %240 = vmatprep.subr.mxu0 0.0
    %241 = vmatpush1.msra.mxu0 0.0
    %242 = vmatprep.subr.mxu0 0.0
    %243 = vmatpush1.msra.mxu0 0.0
    %244 = vmatprep.subr.mxu0 0.0
    %245 = vmatpush1.msra.mxu0 0.0
    %246 = vmatprep.subr.mxu0 0.0
    %247 = vmatpush1.msra.mxu0 0.0
    %248 = vmatprep.subr.mxu0 0.0
    %249 = vmatpush1.msra.mxu0 0.0
    %250 = vmatprep.subr.mxu0 0.0
    %251 = vmatpush1.msra.mxu0 0.0
    %252 = vmatprep.subr.mxu0 0.0
    %253 = vmatpush1.msra.mxu0 0.0
    %254 = vmatprep.subr.mxu0 0.0
    %255 = vmatpush1.msra.mxu0 0.0
    %256 = vmatprep.subr.mxu0 0.0
    %257 = vmatpush1.msra.mxu0 0.0
    %258 = vmatprep.subr.mxu0 0.0
    %259 = vmatpush1.msra.mxu0 0.0
    %260 = vmatprep.mubr.f32.mxu0 0.0
    %261 = vmatmul.mubr.f32.gmra.mrb[0].mxu0 %v173
    %v262 = vpop.f32.mrb[0].mxu0
    %v263 = vadd.f32 0.0, %v262
    %v264 = vpop.f32.mrb[0].mxu0
    %265 = vmatprep.mubr.f32.mxu0 0.0
    %266 = vmatmul.mubr.f32.gmra.mrb[0].mxu0 %v176
    %v267 = vpop.f32.mrb[0].mxu0
    %v268 = vadd.f32 0.0, %v267
    %v269 = vpop.f32.mrb[0].mxu0
    %270 = vmatprep.mubr.f32.mxu0 0.0
    %271 = vmatmul.mubr.f32.gmra.mrb[0].mxu0 %v179
    %v272 = vpop.f32.mrb[0].mxu0
    %v273 = vadd.f32 0.0, %v272
    %v274 = vpop.f32.mrb[0].mxu0
    %275 = vmatprep.mubr.f32.mxu0 0.0
    %276 = vmatmul.mubr.f32.gmra.mrb[0].mxu0 %v182
    %v277 = vpop.f32.mrb[0].mxu0
    %v278 = vadd.f32 0.0, %v277
    %v279 = vpop.f32.mrb[0].mxu0
    %280 = vmatprep.mubr.f32.mxu0 0.0
    %281 = vmatmul.mubr.f32.gmra.mrb[0].mxu0 %v185
    %v282 = vpop.f32.mrb[0].mxu0
    %v283 = vadd.f32 0.0, %v282
    %v284 = vpop.f32.mrb[0].mxu0
    %285 = vmatprep.mubr.f32.mxu0 0.0
    %286 = vmatmul.mubr.f32.gmra.mrb[0].mxu0 %v188
    %v287 = vpop.f32.mrb[0].mxu0
    %v288 = vadd.f32 0.0, %v287
    %v289 = vpop.f32.mrb[0].mxu0
    %290 = vmatprep.mubr.f32.mxu0 0.0
    %291 = vmatmul.mubr.f32.gmra.mrb[0].mxu0 %v191
    %v292 = vpop.f32.mrb[0].mxu0
    %v293 = vadd.f32 0.0, %v292
    %v294 = vpop.f32.mrb[0].mxu0
    %295 = vmatprep.mubr.f32.mxu0 0.0
    %296 = vmatmul.mubr.f32.gmra.mrb[0].mxu0 %v194
    %v297 = vpop.f32.mrb[0].mxu0
    %v298 = vadd.f32 0.0, %v297
    %v299 = vpop.f32.mrb[0].mxu0
    %300 = vdwg.mxu0
    %v301 = vld [vmem:[%s3] sm:$0x3]
    %v303 = vsel %vm171, %v301, 0
    %305 = vmatprep.subr.mxu0 0.0
    %306 = vmatpush1.xpose.msra.mxu0 %v173
    %307 = vmatprep.subr.mxu0 0.0
    %308 = vmatpush1.xpose.msra.mxu0 %v176
    %309 = vmatprep.subr.mxu0 0.0
    %310 = vmatpush1.xpose.msra.mxu0 %v179
    %311 = vmatprep.subr.mxu0 0.0
    %312 = vmatpush1.xpose.msra.mxu0 %v182
    %313 = vmatprep.subr.mxu0 0.0
    %314 = vmatpush1.xpose.msra.mxu0 %v185
    %315 = vmatprep.subr.mxu0 0.0
    %316 = vmatpush1.xpose.msra.mxu0 %v188
    %317 = vmatprep.subr.mxu0 0.0
    %318 = vmatpush1.xpose.msra.mxu0 %v191
    %319 = vmatprep.subr.mxu0 0.0
    %320 = vmatpush1.xpose.msra.mxu0 %v194
    %321 = vmatprep.subr.mxu0 0.0
    %322 = vmatpush1.xpose.msra.mxu0 0.0
    %323 = vmatprep.subr.mxu0 0.0
    %324 = vmatpush1.xpose.msra.mxu0 0.0
    %325 = vmatprep.subr.mxu0 0.0
    %326 = vmatpush1.xpose.msra.mxu0 0.0
    %327 = vmatprep.subr.mxu0 0.0
    %328 = vmatpush1.xpose.msra.mxu0 0.0
    %329 = vmatprep.subr.mxu0 0.0
    %330 = vmatpush1.xpose.msra.mxu0 0.0
    %331 = vmatprep.subr.mxu0 0.0
    %332 = vmatpush1.xpose.msra.mxu0 0.0
    %333 = vmatprep.subr.mxu0 0.0
    %334 = vmatpush1.xpose.msra.mxu0 0.0
    %335 = vmatprep.subr.mxu0 0.0
    %336 = vmatpush1.xpose.msra.mxu0 0.0
    %337 = vmatprep.subr.mxu0 0.0
    %338 = vmatpush1.xpose.msra.mxu0 0.0
    %339 = vmatprep.subr.mxu0 0.0
    %340 = vmatpush1.xpose.msra.mxu0 0.0
    %341 = vmatprep.subr.mxu0 0.0
    %342 = vmatpush1.xpose.msra.mxu0 0.0
    %343 = vmatprep.subr.mxu0 0.0
    %344 = vmatpush1.xpose.msra.mxu0 0.0
    %345 = vmatprep.subr.mxu0 0.0
    %346 = vmatpush1.xpose.msra.mxu0 0.0
    %347 = vmatprep.subr.mxu0 0.0
    %348 = vmatpush1.xpose.msra.mxu0 0.0
    %349 = vmatprep.subr.mxu0 0.0
    %350 = vmatpush1.xpose.msra.mxu0 0.0
    %351 = vmatprep.subr.mxu0 0.0
    %352 = vmatpush1.xpose.msra.mxu0 0.0
    %353 = vmatprep.subr.mxu0 0.0
    %354 = vmatpush1.xpose.msra.mxu0 0.0
    %355 = vmatprep.subr.mxu0 0.0
    %356 = vmatpush1.xpose.msra.mxu0 0.0
    %357 = vmatprep.subr.mxu0 0.0
    %358 = vmatpush1.xpose.msra.mxu0 0.0
    %359 = vmatprep.subr.mxu0 0.0
    %360 = vmatpush1.xpose.msra.mxu0 0.0
    %361 = vmatprep.subr.mxu0 0.0
    %362 = vmatpush1.xpose.msra.mxu0 0.0
    %363 = vmatprep.subr.mxu0 0.0
    %364 = vmatpush1.xpose.msra.mxu0 0.0
    %365 = vmatprep.subr.mxu0 0.0
    %366 = vmatpush1.xpose.msra.mxu0 0.0
    %367 = vmatprep.subr.mxu0 0.0
    %368 = vmatpush1.xpose.msra.mxu0 0.0
    %369 = vmatprep.mubr.f32.mxu0 0.0
    %370 = vmatmul.mubr.f32.gmra.mrb[0].mxu0 %v303
    %v371 = vpop.f32.mrb[0].mxu0
    %v372 = vadd.f32 0.0, %v371
    %v373 = vpop.f32.mrb[0].mxu0
    %374 = vdwg.mxu0
    %376 = vset.pattern.permute.xlu0 0
    %377 = vperm.xlu0 %376, %v263
    %v378 = vpop.permute.xlu0 %377
    %381 = vset.pattern.permute.xlu0 0
    %382 = vperm.xlu0 %381, %v268
    %v383 = vpop.permute.xlu0 %382
    %386 = vset.pattern.permute.xlu0 0
    %387 = vperm.xlu0 %386, %v273
    %v388 = vpop.permute.xlu0 %387
    %391 = vset.pattern.permute.xlu0 0
    %392 = vperm.xlu0 %391, %v278
    %v393 = vpop.permute.xlu0 %392
    %396 = vset.pattern.permute.xlu0 0
    %397 = vperm.xlu0 %396, %v283
    %v398 = vpop.permute.xlu0 %397
    %401 = vset.pattern.permute.xlu0 0
    %402 = vperm.xlu0 %401, %v288
    %v403 = vpop.permute.xlu0 %402
    %406 = vset.pattern.permute.xlu0 0
    %407 = vperm.xlu0 %406, %v293
    %v408 = vpop.permute.xlu0 %407
    %411 = vset.pattern.permute.xlu0 0
    %412 = vperm.xlu0 %411, %v298
    %v413 = vpop.permute.xlu0 %412
    %v415 = vlaneseq
    %v416 = vshrl.u32 %v415, 7
    %v417 = vsub.s32 0, %v416
    %v418 = vrot.slane %v372, %v417
    %v419 = vadd.f32 %v378, %v418
    %v420 = vadd.f32 %v383, %v418
    %v421 = vadd.f32 %v388, %v418
    %v422 = vadd.f32 %v393, %v418
    %v423 = vadd.f32 %v398, %v418
    %v424 = vadd.f32 %v403, %v418
    %v425 = vadd.f32 %v408, %v418
    %v426 = vadd.f32 %v413, %v418
    %vm427 = vcmp.ge.f32.partialorder %v419, 0.0
    %vm428 = vcmp.ge.f32.partialorder %v420, 0.0
    %vm429 = vcmp.ge.f32.partialorder %v421, 0.0
    %vm430 = vcmp.ge.f32.partialorder %v422, 0.0
    %vm431 = vcmp.ge.f32.partialorder %v423, 0.0
    %vm432 = vcmp.ge.f32.partialorder %v424, 0.0
    %vm433 = vcmp.ge.f32.partialorder %v425, 0.0
    %vm434 = vcmp.ge.f32.partialorder %v426, 0.0
    %v435 = vmul.f32 %v419, 0.2
    %v436 = vmul.f32 %v420, 0.2
    %v437 = vmul.f32 %v421, 0.2
    %v438 = vmul.f32 %v422, 0.2
    %v439 = vmul.f32 %v423, 0.2
    %v440 = vmul.f32 %v424, 0.2
    %v441 = vmul.f32 %v425, 0.2
    %v442 = vmul.f32 %v426, 0.2
    %v443 = vsel %vm427, %v419, %v435
    %v444 = vsel %vm428, %v420, %v436
    %v445 = vsel %vm429, %v421, %v437
    %v446 = vsel %vm430, %v422, %v438
    %v447 = vsel %vm431, %v423, %v439
    %v448 = vsel %vm432, %v424, %v440
    %v449 = vsel %vm433, %v425, %v441
    %v450 = vsel %vm434, %v426, %v442
    %v451 = vsel %vm61, 65537, 0
    %v452 = vsel %vm62, 65537, 0
    %v453 = vsel %vm63, 65537, 0
    %v454 = vsel %vm64, 65537, 0
    %v455 = vsel %vm65, 65537, 0
    %v456 = vsel %vm66, 65537, 0
    %v457 = vsel %vm67, 65537, 0
    %v458 = vsel %vm68, 65537, 0
    %v459 = vunpack.c.l.b16 %v451
    %v460 = vunpack.c.l.b16 %v452
    %v461 = vunpack.c.l.b16 %v453
    %v462 = vunpack.c.l.b16 %v454
    %v463 = vunpack.c.l.b16 %v455
    %v464 = vunpack.c.l.b16 %v456
    %v465 = vunpack.c.l.b16 %v457
    %v466 = vunpack.c.l.b16 %v458
    %vm467 = vcmp.ne.s32.totalorder %v459, 0
    %vm468 = vcmp.ne.s32.totalorder %v460, 0
    %vm469 = vcmp.ne.s32.totalorder %v461, 0
    %vm470 = vcmp.ne.s32.totalorder %v462, 0
    %vm471 = vcmp.ne.s32.totalorder %v463, 0
    %vm472 = vcmp.ne.s32.totalorder %v464, 0
    %vm473 = vcmp.ne.s32.totalorder %v465, 0
    %vm474 = vcmp.ne.s32.totalorder %v466, 0
    %v475 = vsel %vm467, %v443, -1e+30
    %v476 = vsel %vm468, %v444, -1e+30
    %v477 = vsel %vm469, %v445, -1e+30
    %v478 = vsel %vm470, %v446, -1e+30
    %v479 = vsel %vm471, %v447, -1e+30
    %v480 = vsel %vm472, %v448, -1e+30
    %v481 = vsel %vm473, %v449, -1e+30
    %v482 = vsel %vm474, %v450, -1e+30
    %v483 = vsel %vm171, %v475, -inf
    %484 = vmax.xlane.f32.xlu0 %v483
    %v485 = vpop.xlane.xlu0 %484
    %v486 = vsel %vm171, %v476, -inf
    %487 = vmax.xlane.f32.xlu0 %v486
    %v488 = vpop.xlane.xlu0 %487
    %v489 = vsel %vm171, %v477, -inf
    %490 = vmax.xlane.f32.xlu0 %v489
    %v491 = vpop.xlane.xlu0 %490
    %v492 = vsel %vm171, %v478, -inf
    %493 = vmax.xlane.f32.xlu0 %v492
    %v494 = vpop.xlane.xlu0 %493
    %v495 = vsel %vm171, %v479, -inf
    %496 = vmax.xlane.f32.xlu0 %v495
    %v497 = vpop.xlane.xlu0 %496
    %v498 = vsel %vm171, %v480, -inf
    %499 = vmax.xlane.f32.xlu0 %v498
    %v500 = vpop.xlane.xlu0 %499
    %v501 = vsel %vm171, %v481, -inf
    %502 = vmax.xlane.f32.xlu0 %v501
    %v503 = vpop.xlane.xlu0 %502
    %v504 = vsel %vm171, %v482, -inf
    %505 = vmax.xlane.f32.xlu0 %v504
    %v506 = vpop.xlane.xlu0 %505
    %v507 = vsub.f32 %v475, %v485
    %v508 = vsub.f32 %v476, %v488
    %v509 = vsub.f32 %v477, %v491
    %v510 = vsub.f32 %v478, %v494
    %v511 = vsub.f32 %v479, %v497
    %v512 = vsub.f32 %v480, %v500
    %v513 = vsub.f32 %v481, %v503
    %v514 = vsub.f32 %v482, %v506
    %v515 = vmul.f32 %v507, 1.442695
    %v516 = vpow.pop %v515
    %v517 = vmul.f32 %v508, 1.442695
    %v518 = vpow.pop %v517
    %v519 = vmul.f32 %v509, 1.442695
    %v520 = vpow.pop %v519
    %v521 = vmul.f32 %v510, 1.442695
    %v522 = vpow.pop %v521
    %v523 = vmul.f32 %v511, 1.442695
    %v524 = vpow.pop %v523
    %v525 = vmul.f32 %v512, 1.442695
    %v526 = vpow.pop %v525
    %v527 = vmul.f32 %v513, 1.442695
    %v528 = vpow.pop %v527
    %v529 = vmul.f32 %v514, 1.442695
    %v530 = vpow.pop %v529
    %v531 = vsel %vm171, %v516, 0.0
    %532 = vadd.xlane.f32.xlu0 %v531
    %v533 = vpop.xlane.xlu0 %532
    %v534 = vsel %vm171, %v518, 0.0
    %535 = vadd.xlane.f32.xlu0 %v534
    %v536 = vpop.xlane.xlu0 %535
    %v537 = vsel %vm171, %v520, 0.0
    %538 = vadd.xlane.f32.xlu0 %v537
    %v539 = vpop.xlane.xlu0 %538
    %v540 = vsel %vm171, %v522, 0.0
    %541 = vadd.xlane.f32.xlu0 %v540
    %v542 = vpop.xlane.xlu0 %541
    %v543 = vsel %vm171, %v524, 0.0
    %544 = vadd.xlane.f32.xlu0 %v543
    %v545 = vpop.xlane.xlu0 %544
    %v546 = vsel %vm171, %v526, 0.0
    %547 = vadd.xlane.f32.xlu0 %v546
    %v548 = vpop.xlane.xlu0 %547
    %v549 = vsel %vm171, %v528, 0.0
    %550 = vadd.xlane.f32.xlu0 %v549
    %v551 = vpop.xlane.xlu0 %550
    %v552 = vsel %vm171, %v530, 0.0
    %553 = vadd.xlane.f32.xlu0 %v552
    %v554 = vpop.xlane.xlu0 %553
    %v555 = vpack.c.bf16 %v518, %v516
    %v556 = vpack.c.bf16 %v522, %v520
    %v557 = vpack.c.bf16 %v526, %v524
    %v558 = vpack.c.bf16 %v530, %v528
    %v560 = vsel %vm171, %v555, 0
    %v563 = vsel %vm171, %v556, 0
    %v566 = vsel %vm171, %v557, 0
    %v569 = vsel %vm171, %v558, 0
    %571 = vmatprep.subr.bf16.mxu0 0
    %572 = vmatpush1.bf16.msra.mxu0 %v159
    %573 = vmatprep.subr.bf16.mxu0 0
    %574 = vmatpush1.bf16.msra.mxu0 %v160
    %575 = vmatprep.subr.bf16.mxu0 0
    %576 = vmatpush1.bf16.msra.mxu0 %v161
    %577 = vmatprep.subr.bf16.mxu0 0
    %578 = vmatpush1.bf16.msra.mxu0 %v162
    %579 = vmatprep.subr.bf16.mxu0 0
    %580 = vmatpush1.bf16.msra.mxu0 0
    %581 = vmatprep.subr.bf16.mxu0 0
    %582 = vmatpush1.bf16.msra.mxu0 0
    %583 = vmatprep.subr.bf16.mxu0 0
    %584 = vmatpush1.bf16.msra.mxu0 0
    %585 = vmatprep.subr.bf16.mxu0 0
    %586 = vmatpush1.bf16.msra.mxu0 0
    %587 = vmatprep.subr.bf16.mxu0 0
    %588 = vmatpush1.bf16.msra.mxu0 0
    %589 = vmatprep.subr.bf16.mxu0 0
    %590 = vmatpush1.bf16.msra.mxu0 0
    %591 = vmatprep.subr.bf16.mxu0 0
    %592 = vmatpush1.bf16.msra.mxu0 0
    %593 = vmatprep.subr.bf16.mxu0 0
    %594 = vmatpush1.bf16.msra.mxu0 0
    %595 = vmatprep.subr.bf16.mxu0 0
    %596 = vmatpush1.bf16.msra.mxu0 0
    %597 = vmatprep.subr.bf16.mxu0 0
    %598 = vmatpush1.bf16.msra.mxu0 0
    %599 = vmatprep.subr.bf16.mxu0 0
    %600 = vmatpush1.bf16.msra.mxu0 0
    %601 = vmatprep.subr.bf16.mxu0 0
    %602 = vmatpush1.bf16.msra.mxu0 0
    %603 = vmatprep.mubr.bf16.mxu0 0
    %604 = vmatmul.mubr.bf16.gmra.mrb[0].mxu0 %v560
    %v605 = vpop.f32.mrb[0].mxu0
    %v606 = vadd.f32 0.0, %v605
    %v607 = vpop.f32.mrb[0].mxu0
    %v608 = vpop.f32.mrb[0].mxu0
    %v609 = vadd.f32 0.0, %v608
    %v610 = vpop.f32.mrb[0].mxu0
    %611 = vmatprep.mubr.bf16.mxu0 0
    %612 = vmatmul.mubr.bf16.gmra.mrb[0].mxu0 %v563
    %v613 = vpop.f32.mrb[0].mxu0
    %v614 = vadd.f32 0.0, %v613
    %v615 = vpop.f32.mrb[0].mxu0
    %v616 = vpop.f32.mrb[0].mxu0
    %v617 = vadd.f32 0.0, %v616
    %v618 = vpop.f32.mrb[0].mxu0
    %619 = vmatprep.mubr.bf16.mxu0 0
    %620 = vmatmul.mubr.bf16.gmra.mrb[0].mxu0 %v566
    %v621 = vpop.f32.mrb[0].mxu0
    %v622 = vadd.f32 0.0, %v621
    %v623 = vpop.f32.mrb[0].mxu0
    %v624 = vpop.f32.mrb[0].mxu0
    %v625 = vadd.f32 0.0, %v624
    %v626 = vpop.f32.mrb[0].mxu0
    %627 = vmatprep.mubr.bf16.mxu0 0
    %628 = vmatmul.mubr.bf16.gmra.mrb[0].mxu0 %v569
    %v629 = vpop.f32.mrb[0].mxu0
    %v630 = vadd.f32 0.0, %v629
    %v631 = vpop.f32.mrb[0].mxu0
    %v632 = vpop.f32.mrb[0].mxu0
    %v633 = vadd.f32 0.0, %v632
    %v634 = vpop.f32.mrb[0].mxu0
    %635 = vdwg.mxu0
    %v636 = vrcp.pop %v533
    %v637 = vrcp.pop %v536
    %v638 = vrcp.pop %v539
    %v639 = vrcp.pop %v542
    %v640 = vrcp.pop %v545
    %v641 = vrcp.pop %v548
    %v642 = vrcp.pop %v551
    %v643 = vrcp.pop %v554
    %v644 = vmul.f32 %v606, %v636
    %v645 = vmul.f32 %v609, %v637
    %v646 = vmul.f32 %v614, %v638
    %v647 = vmul.f32 %v617, %v639
    %v648 = vmul.f32 %v622, %v640
    %v649 = vmul.f32 %v625, %v641
    %v650 = vmul.f32 %v630, %v642
    %v651 = vmul.f32 %v633, %v643
    %652 = vset.pattern.permute.xlu0 1
    %653 = vperm.xlu0 %652, %v263
    %v654 = vpop.permute.xlu0 %653
    %656 = vset.pattern.permute.xlu0 1
    %657 = vperm.xlu0 %656, %v268
    %v658 = vpop.permute.xlu0 %657
    %660 = vset.pattern.permute.xlu0 1
    %661 = vperm.xlu0 %660, %v273
    %v662 = vpop.permute.xlu0 %661
    %664 = vset.pattern.permute.xlu0 1
    %665 = vperm.xlu0 %664, %v278
    %v666 = vpop.permute.xlu0 %665
    %668 = vset.pattern.permute.xlu0 1
    %669 = vperm.xlu0 %668, %v283
    %v670 = vpop.permute.xlu0 %669
    %672 = vset.pattern.permute.xlu0 1
    %673 = vperm.xlu0 %672, %v288
    %v674 = vpop.permute.xlu0 %673
    %676 = vset.pattern.permute.xlu0 1
    %677 = vperm.xlu0 %676, %v293
    %v678 = vpop.permute.xlu0 %677
    %680 = vset.pattern.permute.xlu0 1
    %681 = vperm.xlu0 %680, %v298
    %v682 = vpop.permute.xlu0 %681
    %v684 = vlaneseq
    %v685 = vshrl.u32 %v684, 7
    %v686 = vsub.s32 1, %v685
    %v687 = vrot.slane %v372, %v686
    %v688 = vadd.f32 %v654, %v687
    %v689 = vadd.f32 %v658, %v687
    %v690 = vadd.f32 %v662, %v687
    %v691 = vadd.f32 %v666, %v687
    %v692 = vadd.f32 %v670, %v687
    %v693 = vadd.f32 %v674, %v687
    %v694 = vadd.f32 %v678, %v687
    %v695 = vadd.f32 %v682, %v687
    %vm696 = vcmp.ge.f32.partialorder %v688, 0.0
    %vm697 = vcmp.ge.f32.partialorder %v689, 0.0
    %vm698 = vcmp.ge.f32.partialorder %v690, 0.0
    %vm699 = vcmp.ge.f32.partialorder %v691, 0.0
    %vm700 = vcmp.ge.f32.partialorder %v692, 0.0
    %vm701 = vcmp.ge.f32.partialorder %v693, 0.0
    %vm702 = vcmp.ge.f32.partialorder %v694, 0.0
    %vm703 = vcmp.ge.f32.partialorder %v695, 0.0
    %v704 = vmul.f32 %v688, 0.2
    %v705 = vmul.f32 %v689, 0.2
    %v706 = vmul.f32 %v690, 0.2
    %v707 = vmul.f32 %v691, 0.2
    %v708 = vmul.f32 %v692, 0.2
    %v709 = vmul.f32 %v693, 0.2
    %v710 = vmul.f32 %v694, 0.2
    %v711 = vmul.f32 %v695, 0.2
    %v712 = vsel %vm696, %v688, %v704
    %v713 = vsel %vm697, %v689, %v705
    %v714 = vsel %vm698, %v690, %v706
    %v715 = vsel %vm699, %v691, %v707
    %v716 = vsel %vm700, %v692, %v708
    %v717 = vsel %vm701, %v693, %v709
    %v718 = vsel %vm702, %v694, %v710
    %v719 = vsel %vm703, %v695, %v711
    %v720 = vsel %vm467, %v712, -1e+30
    %v721 = vsel %vm468, %v713, -1e+30
    %v722 = vsel %vm469, %v714, -1e+30
    %v723 = vsel %vm470, %v715, -1e+30
    %v724 = vsel %vm471, %v716, -1e+30
    %v725 = vsel %vm472, %v717, -1e+30
    %v726 = vsel %vm473, %v718, -1e+30
    %v727 = vsel %vm474, %v719, -1e+30
    %v728 = vsel %vm171, %v720, -inf
    %729 = vmax.xlane.f32.xlu0 %v728
    %v730 = vpop.xlane.xlu0 %729
    %v731 = vsel %vm171, %v721, -inf
    %732 = vmax.xlane.f32.xlu0 %v731
    %v733 = vpop.xlane.xlu0 %732
    %v734 = vsel %vm171, %v722, -inf
    %735 = vmax.xlane.f32.xlu0 %v734
    %v736 = vpop.xlane.xlu0 %735
    %v737 = vsel %vm171, %v723, -inf
    %738 = vmax.xlane.f32.xlu0 %v737
    %v739 = vpop.xlane.xlu0 %738
    %v740 = vsel %vm171, %v724, -inf
    %741 = vmax.xlane.f32.xlu0 %v740
    %v742 = vpop.xlane.xlu0 %741
    %v743 = vsel %vm171, %v725, -inf
    %744 = vmax.xlane.f32.xlu0 %v743
    %v745 = vpop.xlane.xlu0 %744
    %v746 = vsel %vm171, %v726, -inf
    %747 = vmax.xlane.f32.xlu0 %v746
    %v748 = vpop.xlane.xlu0 %747
    %v749 = vsel %vm171, %v727, -inf
    %750 = vmax.xlane.f32.xlu0 %v749
    %v751 = vpop.xlane.xlu0 %750
    %v752 = vsub.f32 %v720, %v730
    %v753 = vsub.f32 %v721, %v733
    %v754 = vsub.f32 %v722, %v736
    %v755 = vsub.f32 %v723, %v739
    %v756 = vsub.f32 %v724, %v742
    %v757 = vsub.f32 %v725, %v745
    %v758 = vsub.f32 %v726, %v748
    %v759 = vsub.f32 %v727, %v751
    %v760 = vmul.f32 %v752, 1.442695
    %v761 = vpow.pop %v760
    %v762 = vmul.f32 %v753, 1.442695
    %v763 = vpow.pop %v762
    %v764 = vmul.f32 %v754, 1.442695
    %v765 = vpow.pop %v764
    %v766 = vmul.f32 %v755, 1.442695
    %v767 = vpow.pop %v766
    %v768 = vmul.f32 %v756, 1.442695
    %v769 = vpow.pop %v768
    %v770 = vmul.f32 %v757, 1.442695
    %v771 = vpow.pop %v770
    %v772 = vmul.f32 %v758, 1.442695
    %v773 = vpow.pop %v772
    %v774 = vmul.f32 %v759, 1.442695
    %v775 = vpow.pop %v774
    %v776 = vsel %vm171, %v761, 0.0
    %777 = vadd.xlane.f32.xlu0 %v776
    %v778 = vpop.xlane.xlu0 %777
    %v779 = vsel %vm171, %v763, 0.0
    %780 = vadd.xlane.f32.xlu0 %v779
    %v781 = vpop.xlane.xlu0 %780
    %v782 = vsel %vm171, %v765, 0.0
    %783 = vadd.xlane.f32.xlu0 %v782
    %v784 = vpop.xlane.xlu0 %783
    %v785 = vsel %vm171, %v767, 0.0
    %786 = vadd.xlane.f32.xlu0 %v785
    %v787 = vpop.xlane.xlu0 %786
    %v788 = vsel %vm171, %v769, 0.0
    %789 = vadd.xlane.f32.xlu0 %v788
    %v790 = vpop.xlane.xlu0 %789
    %v791 = vsel %vm171, %v771, 0.0
    %792 = vadd.xlane.f32.xlu0 %v791
    %v793 = vpop.xlane.xlu0 %792
    %v794 = vsel %vm171, %v773, 0.0
    %795 = vadd.xlane.f32.xlu0 %v794
    %v796 = vpop.xlane.xlu0 %795
    %v797 = vsel %vm171, %v775, 0.0
    %798 = vadd.xlane.f32.xlu0 %v797
    %v799 = vpop.xlane.xlu0 %798
    %v800 = vpack.c.bf16 %v763, %v761
    %v801 = vpack.c.bf16 %v767, %v765
    %v802 = vpack.c.bf16 %v771, %v769
    %v803 = vpack.c.bf16 %v775, %v773
    %808 = vrot.lane.b32.xlu0 %v159, 96
    %v809 = vpop.permute.xlu0 %808
    %810 = vrot.lane.b32.xlu0 %v160, 96
    %v811 = vpop.permute.xlu0 %810
    %812 = vrot.lane.b32.xlu0 %v161, 96
    %v813 = vpop.permute.xlu0 %812
    %814 = vrot.lane.b32.xlu0 %v162, 96
    %v815 = vpop.permute.xlu0 %814
    %v821 = vsel %vm171, %v800, 0
    %v824 = vsel %vm171, %v801, 0
    %v827 = vsel %vm171, %v802, 0
    %v830 = vsel %vm171, %v803, 0
    %832 = vmatprep.subr.bf16.mxu0 0
    %833 = vmatpush1.bf16.msra.mxu0 %v809
    %834 = vmatprep.subr.bf16.mxu0 0
    %835 = vmatpush1.bf16.msra.mxu0 %v811
    %836 = vmatprep.subr.bf16.mxu0 0
    %837 = vmatpush1.bf16.msra.mxu0 %v813
    %838 = vmatprep.subr.bf16.mxu0 0
    %839 = vmatpush1.bf16.msra.mxu0 %v815
    %840 = vmatprep.subr.bf16.mxu0 0
    %841 = vmatpush1.bf16.msra.mxu0 0
    %842 = vmatprep.subr.bf16.mxu0 0
    %843 = vmatpush1.bf16.msra.mxu0 0
    %844 = vmatprep.subr.bf16.mxu0 0
    %845 = vmatpush1.bf16.msra.mxu0 0
    %846 = vmatprep.subr.bf16.mxu0 0
    %847 = vmatpush1.bf16.msra.mxu0 0
    %848 = vmatprep.subr.bf16.mxu0 0
    %849 = vmatpush1.bf16.msra.mxu0 0
    %850 = vmatprep.subr.bf16.mxu0 0
    %851 = vmatpush1.bf16.msra.mxu0 0
    %852 = vmatprep.subr.bf16.mxu0 0
    %853 = vmatpush1.bf16.msra.mxu0 0
    %854 = vmatprep.subr.bf16.mxu0 0
    %855 = vmatpush1.bf16.msra.mxu0 0
    %856 = vmatprep.subr.bf16.mxu0 0
    %857 = vmatpush1.bf16.msra.mxu0 0
    %858 = vmatprep.subr.bf16.mxu0 0
    %859 = vmatpush1.bf16.msra.mxu0 0
    %860 = vmatprep.subr.bf16.mxu0 0
    %861 = vmatpush1.bf16.msra.mxu0 0
    %862 = vmatprep.subr.bf16.mxu0 0
    %863 = vmatpush1.bf16.msra.mxu0 0
    %864 = vmatprep.mubr.bf16.mxu0 0
    %865 = vmatmul.mubr.bf16.gmra.mrb[0].mxu0 %v821
    %v866 = vpop.f32.mrb[0].mxu0
    %v867 = vadd.f32 0.0, %v866
    %v868 = vpop.f32.mrb[0].mxu0
    %v869 = vpop.f32.mrb[0].mxu0
    %v870 = vadd.f32 0.0, %v869
    %v871 = vpop.f32.mrb[0].mxu0
    %872 = vmatprep.mubr.bf16.mxu0 0
    %873 = vmatmul.mubr.bf16.gmra.mrb[0].mxu0 %v824
    %v874 = vpop.f32.mrb[0].mxu0
    %v875 = vadd.f32 0.0, %v874
    %v876 = vpop.f32.mrb[0].mxu0
    %v877 = vpop.f32.mrb[0].mxu0
    %v878 = vadd.f32 0.0, %v877
    %v879 = vpop.f32.mrb[0].mxu0
    %880 = vmatprep.mubr.bf16.mxu0 0
    %881 = vmatmul.mubr.bf16.gmra.mrb[0].mxu0 %v827
    %v882 = vpop.f32.mrb[0].mxu0
    %v883 = vadd.f32 0.0, %v882
    %v884 = vpop.f32.mrb[0].mxu0
    %v885 = vpop.f32.mrb[0].mxu0
    %v886 = vadd.f32 0.0, %v885
    %v887 = vpop.f32.mrb[0].mxu0
    %888 = vmatprep.mubr.bf16.mxu0 0
    %889 = vmatmul.mubr.bf16.gmra.mrb[0].mxu0 %v830
    %v890 = vpop.f32.mrb[0].mxu0
    %v891 = vadd.f32 0.0, %v890
    %v892 = vpop.f32.mrb[0].mxu0
    %v893 = vpop.f32.mrb[0].mxu0
    %v894 = vadd.f32 0.0, %v893
    %v895 = vpop.f32.mrb[0].mxu0
    %896 = vdwg.mxu0
    %v897 = vrcp.pop %v778
    %v898 = vrcp.pop %v781
    %v899 = vrcp.pop %v784
    %v900 = vrcp.pop %v787
    %v901 = vrcp.pop %v790
    %v902 = vrcp.pop %v793
    %v903 = vrcp.pop %v796
    %v904 = vrcp.pop %v799
    %v905 = vmul.f32 %v867, %v897
    %v906 = vmul.f32 %v870, %v898
    %v907 = vmul.f32 %v875, %v899
    %v908 = vmul.f32 %v878, %v900
    %v909 = vmul.f32 %v883, %v901
    %v910 = vmul.f32 %v886, %v902
    %v911 = vmul.f32 %v891, %v903
    %v912 = vmul.f32 %v894, %v904
    %921 = vrot.lane.b32.xlu0 %v905, 32
    %v922 = vpop.permute.xlu0 %921
    %923 = vrot.lane.b32.xlu0 %v906, 32
    %v924 = vpop.permute.xlu0 %923
    %925 = vrot.lane.b32.xlu0 %v907, 32
    %v926 = vpop.permute.xlu0 %925
    %927 = vrot.lane.b32.xlu0 %v908, 32
    %v928 = vpop.permute.xlu0 %927
    %929 = vrot.lane.b32.xlu0 %v909, 32
    %v930 = vpop.permute.xlu0 %929
    %931 = vrot.lane.b32.xlu0 %v910, 32
    %v932 = vpop.permute.xlu0 %931
    %933 = vrot.lane.b32.xlu0 %v911, 32
    %v934 = vpop.permute.xlu0 %933
    %935 = vrot.lane.b32.xlu0 %v912, 32
    %v936 = vpop.permute.xlu0 %935
    %vm945 = vcmask 261120
    %v946 = vsel %vm945, %v644, %v922
    %v947 = vsel %vm945, %v645, %v924
    %v948 = vsel %vm945, %v646, %v926
    %v949 = vsel %vm945, %v647, %v928
    %v950 = vsel %vm945, %v648, %v930
    %v951 = vsel %vm945, %v649, %v932
    %v952 = vsel %vm945, %v650, %v934
    %v953 = vsel %vm945, %v651, %v936
    %vm954 = vcmp.gt.f32.partialorder %v946, 0.0
    %vm955 = vcmp.gt.f32.partialorder %v947, 0.0
    %vm956 = vcmp.gt.f32.partialorder %v948, 0.0
    %vm957 = vcmp.gt.f32.partialorder %v949, 0.0
    %vm958 = vcmp.gt.f32.partialorder %v950, 0.0
    %vm959 = vcmp.gt.f32.partialorder %v951, 0.0
    %vm960 = vcmp.gt.f32.partialorder %v952, 0.0
    %vm961 = vcmp.gt.f32.partialorder %v953, 0.0
    %v962 = vmin.f32 %v946, 0.0
    %v963 = vmin.f32 %v947, 0.0
    %v964 = vmin.f32 %v948, 0.0
    %v965 = vmin.f32 %v949, 0.0
    %v966 = vmin.f32 %v950, 0.0
    %v967 = vmin.f32 %v951, 0.0
    %v968 = vmin.f32 %v952, 0.0
    %v969 = vmin.f32 %v953, 0.0
    %v970 = vmul.f32 %v962, 1.442695
    %v971 = vpow.pop %v970
    %v972 = vmul.f32 %v963, 1.442695
    %v973 = vpow.pop %v972
    %v974 = vmul.f32 %v964, 1.442695
    %v975 = vpow.pop %v974
    %v976 = vmul.f32 %v965, 1.442695
    %v977 = vpow.pop %v976
    %v978 = vmul.f32 %v966, 1.442695
    %v979 = vpow.pop %v978
    %v980 = vmul.f32 %v967, 1.442695
    %v981 = vpow.pop %v980
    %v982 = vmul.f32 %v968, 1.442695
    %v983 = vpow.pop %v982
    %v984 = vmul.f32 %v969, 1.442695
    %v985 = vpow.pop %v984
    %v986 = vsub.f32 %v971, 1.0
    %v987 = vsub.f32 %v973, 1.0
    %v988 = vsub.f32 %v975, 1.0
    %v989 = vsub.f32 %v977, 1.0
    %v990 = vsub.f32 %v979, 1.0
    %v991 = vsub.f32 %v981, 1.0
    %v992 = vsub.f32 %v983, 1.0
    %v993 = vsub.f32 %v985, 1.0
    %v994 = vsel %vm954, %v946, %v986
    %v995 = vsel %vm955, %v947, %v987
    %v996 = vsel %vm956, %v948, %v988
    %v997 = vsel %vm957, %v949, %v989
    %v998 = vsel %vm958, %v950, %v990
    %v999 = vsel %vm959, %v951, %v991
    %v1000 = vsel %vm960, %v952, %v992
    %v1001 = vsel %vm961, %v953, %v993
    %v1002 = vpack.c.bf16 %v995, %v994
    %v1003 = vpack.c.bf16 %v997, %v996
    %v1004 = vpack.c.bf16 %v999, %v998
    %v1005 = vpack.c.bf16 %v1001, %v1000
    %v1006 = vld [vmem:[%s5] sm:$0xf]
    %v1007 = vld [vmem:[%s5 + $0x4] sm:$0xf]
    %v1008 = vld [vmem:[%s5 + $0x8] sm:$0xf]
    %v1009 = vld [vmem:[%s5 + $0xc] sm:$0xf]
    %v1010 = vld [vmem:[%s5 + $0x10] sm:$0xf]
    %v1011 = vld [vmem:[%s5 + $0x14] sm:$0xf]
    %v1012 = vld [vmem:[%s5 + $0x18] sm:$0xf]
    %v1013 = vld [vmem:[%s5 + $0x1c] sm:$0xf]
    %v1022 = vunpack.c.l.b16 %v1006
    %v1023 = vunpack.c.l.b16 %v1007
    %v1024 = vunpack.c.l.b16 %v1008
    %v1025 = vunpack.c.l.b16 %v1009
    %v1026 = vunpack.c.l.b16 %v1010
    %v1027 = vunpack.c.l.b16 %v1011
    %v1028 = vunpack.c.l.b16 %v1012
    %v1029 = vunpack.c.l.b16 %v1013
    %v1030 = vpack.c.b16 %v1023, %v1022
    %v1031 = vpack.c.b16 %v1025, %v1024
    %v1032 = vpack.c.b16 %v1027, %v1026
    %v1033 = vpack.c.b16 %v1029, %v1028
    %v1039 = vsel %vm171, %v1002, 0
    %v1042 = vsel %vm171, %v1003, 0
    %v1045 = vsel %vm171, %v1004, 0
    %v1048 = vsel %vm171, %v1005, 0
    %1050 = vmatprep.subr.bf16.mxu0 0
    %1051 = vmatpush1.bf16.msra.mxu0 %v1030
    %1052 = vmatprep.subr.bf16.mxu0 0
    %1053 = vmatpush1.bf16.msra.mxu0 %v1031
    %1054 = vmatprep.subr.bf16.mxu0 0
    %1055 = vmatpush1.bf16.msra.mxu0 %v1032
    %1056 = vmatprep.subr.bf16.mxu0 0
    %1057 = vmatpush1.bf16.msra.mxu0 %v1033
    %1058 = vmatprep.subr.bf16.mxu0 0
    %1059 = vmatpush1.bf16.msra.mxu0 0
    %1060 = vmatprep.subr.bf16.mxu0 0
    %1061 = vmatpush1.bf16.msra.mxu0 0
    %1062 = vmatprep.subr.bf16.mxu0 0
    %1063 = vmatpush1.bf16.msra.mxu0 0
    %1064 = vmatprep.subr.bf16.mxu0 0
    %1065 = vmatpush1.bf16.msra.mxu0 0
    %1066 = vmatprep.subr.bf16.mxu0 0
    %1067 = vmatpush1.bf16.msra.mxu0 0
    %1068 = vmatprep.subr.bf16.mxu0 0
    %1069 = vmatpush1.bf16.msra.mxu0 0
    %1070 = vmatprep.subr.bf16.mxu0 0
    %1071 = vmatpush1.bf16.msra.mxu0 0
    %1072 = vmatprep.subr.bf16.mxu0 0
    %1073 = vmatpush1.bf16.msra.mxu0 0
    %1074 = vmatprep.subr.bf16.mxu0 0
    %1075 = vmatpush1.bf16.msra.mxu0 0
    %1076 = vmatprep.subr.bf16.mxu0 0
    %1077 = vmatpush1.bf16.msra.mxu0 0
    %1078 = vmatprep.subr.bf16.mxu0 0
    %1079 = vmatpush1.bf16.msra.mxu0 0
    %1080 = vmatprep.subr.bf16.mxu0 0
    %1081 = vmatpush1.bf16.msra.mxu0 0
    %1082 = vmatprep.mubr.bf16.mxu0 0
    %1083 = vmatmul.mubr.bf16.gmra.mrb[0].mxu0 %v1039
    %v1084 = vpop.f32.mrb[0].mxu0
    %v1085 = vadd.f32 0.0, %v1084
    %v1086 = vpop.f32.mrb[0].mxu0
    %v1087 = vpop.f32.mrb[0].mxu0
    %v1088 = vadd.f32 0.0, %v1087
    %v1089 = vpop.f32.mrb[0].mxu0
    %1090 = vmatprep.mubr.bf16.mxu0 0
    %1091 = vmatmul.mubr.bf16.gmra.mrb[0].mxu0 %v1042
    %v1092 = vpop.f32.mrb[0].mxu0
    %v1093 = vadd.f32 0.0, %v1092
    %v1094 = vpop.f32.mrb[0].mxu0
    %v1095 = vpop.f32.mrb[0].mxu0
    %v1096 = vadd.f32 0.0, %v1095
    %v1097 = vpop.f32.mrb[0].mxu0
    %1098 = vmatprep.mubr.bf16.mxu0 0
    %1099 = vmatmul.mubr.bf16.gmra.mrb[0].mxu0 %v1045
    %v1100 = vpop.f32.mrb[0].mxu0
    %v1101 = vadd.f32 0.0, %v1100
    %v1102 = vpop.f32.mrb[0].mxu0
    %v1103 = vpop.f32.mrb[0].mxu0
    %v1104 = vadd.f32 0.0, %v1103
    %v1105 = vpop.f32.mrb[0].mxu0
    %1106 = vmatprep.mubr.bf16.mxu0 0
    %1107 = vmatmul.mubr.bf16.gmra.mrb[0].mxu0 %v1048
    %v1108 = vpop.f32.mrb[0].mxu0
    %v1109 = vadd.f32 0.0, %v1108
    %v1110 = vpop.f32.mrb[0].mxu0
    %v1111 = vpop.f32.mrb[0].mxu0
    %v1112 = vadd.f32 0.0, %v1111
    %v1113 = vpop.f32.mrb[0].mxu0
    %1114 = vdwg.mxu0
    %v1115 = vpack.c.bf16 %v1088, %v1085
    %v1116 = vpack.c.bf16 %v1096, %v1093
    %v1117 = vpack.c.bf16 %v1104, %v1101
    %v1118 = vpack.c.bf16 %v1112, %v1109
    %v1119 = vld [vmem:[%s7] sm:$0xff]
    %v1120 = vld [vmem:[%s7 + $0x8] sm:$0xff]
    %v1121 = vld [vmem:[%s7 + $0x10] sm:$0xff]
    %v1122 = vld [vmem:[%s7 + $0x18] sm:$0xff]
    %v1123 = vld [vmem:[%s7 + $0x20] sm:$0xff]
    %v1124 = vld [vmem:[%s7 + $0x28] sm:$0xff]
    %v1125 = vld [vmem:[%s7 + $0x30] sm:$0xff]
    %v1126 = vld [vmem:[%s7 + $0x38] sm:$0xff]
    %v1128 = vsel %vm171, %v1085, 0
    %v1131 = vsel %vm171, %v1088, 0
    %v1134 = vsel %vm171, %v1093, 0
    %v1137 = vsel %vm171, %v1096, 0
    %v1140 = vsel %vm171, %v1101, 0
    %v1143 = vsel %vm171, %v1104, 0
    %v1146 = vsel %vm171, %v1109, 0
    %v1149 = vsel %vm171, %v1112, 0
    %1151 = vmatprep.subr.mxu0 0.0
    %1152 = vmatpush1.msra.mxu0 %v1119
    %1153 = vmatprep.subr.mxu0 0.0
    %1154 = vmatpush1.msra.mxu0 %v1120
    %1155 = vmatprep.subr.mxu0 0.0
    %1156 = vmatpush1.msra.mxu0 %v1121
    %1157 = vmatprep.subr.mxu0 0.0
    %1158 = vmatpush1.msra.mxu0 %v1122
    %1159 = vmatprep.subr.mxu0 0.0
    %1160 = vmatpush1.msra.mxu0 %v1123
    %1161 = vmatprep.subr.mxu0 0.0
    %1162 = vmatpush1.msra.mxu0 %v1124
    %1163 = vmatprep.subr.mxu0 0.0
    %1164 = vmatpush1.msra.mxu0 %v1125
    %1165 = vmatprep.subr.mxu0 0.0
    %1166 = vmatpush1.msra.mxu0 %v1126
    %1167 = vmatprep.subr.mxu0 0.0
    %1168 = vmatpush1.msra.mxu0 0.0
    %1169 = vmatprep.subr.mxu0 0.0
    %1170 = vmatpush1.msra.mxu0 0.0
    %1171 = vmatprep.subr.mxu0 0.0
    %1172 = vmatpush1.msra.mxu0 0.0
    %1173 = vmatprep.subr.mxu0 0.0
    %1174 = vmatpush1.msra.mxu0 0.0
    %1175 = vmatprep.subr.mxu0 0.0
    %1176 = vmatpush1.msra.mxu0 0.0
    %1177 = vmatprep.subr.mxu0 0.0
    %1178 = vmatpush1.msra.mxu0 0.0
    %1179 = vmatprep.subr.mxu0 0.0
    %1180 = vmatpush1.msra.mxu0 0.0
    %1181 = vmatprep.subr.mxu0 0.0
    %1182 = vmatpush1.msra.mxu0 0.0
    %1183 = vmatprep.subr.mxu0 0.0
    %1184 = vmatpush1.msra.mxu0 0.0
    %1185 = vmatprep.subr.mxu0 0.0
    %1186 = vmatpush1.msra.mxu0 0.0
    %1187 = vmatprep.subr.mxu0 0.0
    %1188 = vmatpush1.msra.mxu0 0.0
    %1189 = vmatprep.subr.mxu0 0.0
    %1190 = vmatpush1.msra.mxu0 0.0
    %1191 = vmatprep.subr.mxu0 0.0
    %1192 = vmatpush1.msra.mxu0 0.0
    %1193 = vmatprep.subr.mxu0 0.0
    %1194 = vmatpush1.msra.mxu0 0.0
    %1195 = vmatprep.subr.mxu0 0.0
    %1196 = vmatpush1.msra.mxu0 0.0
    %1197 = vmatprep.subr.mxu0 0.0
    %1198 = vmatpush1.msra.mxu0 0.0
    %1199 = vmatprep.subr.mxu0 0.0
    %1200 = vmatpush1.msra.mxu0 0.0
    %1201 = vmatprep.subr.mxu0 0.0
    %1202 = vmatpush1.msra.mxu0 0.0
    %1203 = vmatprep.subr.mxu0 0.0
    %1204 = vmatpush1.msra.mxu0 0.0
    %1205 = vmatprep.subr.mxu0 0.0
    %1206 = vmatpush1.msra.mxu0 0.0
    %1207 = vmatprep.subr.mxu0 0.0
    %1208 = vmatpush1.msra.mxu0 0.0
    %1209 = vmatprep.subr.mxu0 0.0
    %1210 = vmatpush1.msra.mxu0 0.0
    %1211 = vmatprep.subr.mxu0 0.0
    %1212 = vmatpush1.msra.mxu0 0.0
    %1213 = vmatprep.subr.mxu0 0.0
    %1214 = vmatpush1.msra.mxu0 0.0
    %1215 = vmatprep.mubr.f32.mxu0 0.0
    %1216 = vmatmul.mubr.f32.gmra.mrb[0].mxu0 %v1128
    %v1217 = vpop.f32.mrb[0].mxu0
    %v1218 = vadd.f32 0.0, %v1217
    %v1219 = vpop.f32.mrb[0].mxu0
    %1220 = vmatprep.mubr.f32.mxu0 0.0
    %1221 = vmatmul.mubr.f32.gmra.mrb[0].mxu0 %v1131
    %v1222 = vpop.f32.mrb[0].mxu0
    %v1223 = vadd.f32 0.0, %v1222
    %v1224 = vpop.f32.mrb[0].mxu0
    %1225 = vmatprep.mubr.f32.mxu0 0.0
    %1226 = vmatmul.mubr.f32.gmra.mrb[0].mxu0 %v1134
    %v1227 = vpop.f32.mrb[0].mxu0
    %v1228 = vadd.f32 0.0, %v1227
    %v1229 = vpop.f32.mrb[0].mxu0
    %1230 = vmatprep.mubr.f32.mxu0 0.0
    %1231 = vmatmul.mubr.f32.gmra.mrb[0].mxu0 %v1137
    %v1232 = vpop.f32.mrb[0].mxu0
    %v1233 = vadd.f32 0.0, %v1232
    %v1234 = vpop.f32.mrb[0].mxu0
    %1235 = vmatprep.mubr.f32.mxu0 0.0
    %1236 = vmatmul.mubr.f32.gmra.mrb[0].mxu0 %v1140
    %v1237 = vpop.f32.mrb[0].mxu0
    %v1238 = vadd.f32 0.0, %v1237
    %v1239 = vpop.f32.mrb[0].mxu0
    %1240 = vmatprep.mubr.f32.mxu0 0.0
    %1241 = vmatmul.mubr.f32.gmra.mrb[0].mxu0 %v1143
    %v1242 = vpop.f32.mrb[0].mxu0
    %v1243 = vadd.f32 0.0, %v1242
    %v1244 = vpop.f32.mrb[0].mxu0
    %1245 = vmatprep.mubr.f32.mxu0 0.0
    %1246 = vmatmul.mubr.f32.gmra.mrb[0].mxu0 %v1146
    %v1247 = vpop.f32.mrb[0].mxu0
    %v1248 = vadd.f32 0.0, %v1247
    %v1249 = vpop.f32.mrb[0].mxu0
    %1250 = vmatprep.mubr.f32.mxu0 0.0
    %1251 = vmatmul.mubr.f32.gmra.mrb[0].mxu0 %v1149
    %v1252 = vpop.f32.mrb[0].mxu0
    %v1253 = vadd.f32 0.0, %v1252
    %v1254 = vpop.f32.mrb[0].mxu0
    %1255 = vdwg.mxu0
    %v1256 = vld [vmem:[%s6] sm:$0x3]
    %v1258 = vsel %vm171, %v1256, 0
    %1260 = vmatprep.subr.mxu0 0.0
    %1261 = vmatpush1.xpose.msra.mxu0 %v1128
    %1262 = vmatprep.subr.mxu0 0.0
    %1263 = vmatpush1.xpose.msra.mxu0 %v1131
    %1264 = vmatprep.subr.mxu0 0.0
    %1265 = vmatpush1.xpose.msra.mxu0 %v1134
    %1266 = vmatprep.subr.mxu0 0.0
    %1267 = vmatpush1.xpose.msra.mxu0 %v1137
    %1268 = vmatprep.subr.mxu0 0.0
    %1269 = vmatpush1.xpose.msra.mxu0 %v1140
    %1270 = vmatprep.subr.mxu0 0.0
    %1271 = vmatpush1.xpose.msra.mxu0 %v1143
    %1272 = vmatprep.subr.mxu0 0.0
    %1273 = vmatpush1.xpose.msra.mxu0 %v1146
    %1274 = vmatprep.subr.mxu0 0.0
    %1275 = vmatpush1.xpose.msra.mxu0 %v1149
    %1276 = vmatprep.subr.mxu0 0.0
    %1277 = vmatpush1.xpose.msra.mxu0 0.0
    %1278 = vmatprep.subr.mxu0 0.0
    %1279 = vmatpush1.xpose.msra.mxu0 0.0
    %1280 = vmatprep.subr.mxu0 0.0
    %1281 = vmatpush1.xpose.msra.mxu0 0.0
    %1282 = vmatprep.subr.mxu0 0.0
    %1283 = vmatpush1.xpose.msra.mxu0 0.0
    %1284 = vmatprep.subr.mxu0 0.0
    %1285 = vmatpush1.xpose.msra.mxu0 0.0
    %1286 = vmatprep.subr.mxu0 0.0
    %1287 = vmatpush1.xpose.msra.mxu0 0.0
    %1288 = vmatprep.subr.mxu0 0.0
    %1289 = vmatpush1.xpose.msra.mxu0 0.0
    %1290 = vmatprep.subr.mxu0 0.0
    %1291 = vmatpush1.xpose.msra.mxu0 0.0
    %1292 = vmatprep.subr.mxu0 0.0
    %1293 = vmatpush1.xpose.msra.mxu0 0.0
    %1294 = vmatprep.subr.mxu0 0.0
    %1295 = vmatpush1.xpose.msra.mxu0 0.0
    %1296 = vmatprep.subr.mxu0 0.0
    %1297 = vmatpush1.xpose.msra.mxu0 0.0
    %1298 = vmatprep.subr.mxu0 0.0
    %1299 = vmatpush1.xpose.msra.mxu0 0.0
    %1300 = vmatprep.subr.mxu0 0.0
    %1301 = vmatpush1.xpose.msra.mxu0 0.0
    %1302 = vmatprep.subr.mxu0 0.0
    %1303 = vmatpush1.xpose.msra.mxu0 0.0
    %1304 = vmatprep.subr.mxu0 0.0
    %1305 = vmatpush1.xpose.msra.mxu0 0.0
    %1306 = vmatprep.subr.mxu0 0.0
    %1307 = vmatpush1.xpose.msra.mxu0 0.0
    %1308 = vmatprep.subr.mxu0 0.0
    %1309 = vmatpush1.xpose.msra.mxu0 0.0
    %1310 = vmatprep.subr.mxu0 0.0
    %1311 = vmatpush1.xpose.msra.mxu0 0.0
    %1312 = vmatprep.subr.mxu0 0.0
    %1313 = vmatpush1.xpose.msra.mxu0 0.0
    %1314 = vmatprep.subr.mxu0 0.0
    %1315 = vmatpush1.xpose.msra.mxu0 0.0
    %1316 = vmatprep.subr.mxu0 0.0
    %1317 = vmatpush1.xpose.msra.mxu0 0.0
    %1318 = vmatprep.subr.mxu0 0.0
    %1319 = vmatpush1.xpose.msra.mxu0 0.0
    %1320 = vmatprep.subr.mxu0 0.0
    %1321 = vmatpush1.xpose.msra.mxu0 0.0
    %1322 = vmatprep.subr.mxu0 0.0
    %1323 = vmatpush1.xpose.msra.mxu0 0.0
    %1324 = vmatprep.mubr.f32.mxu0 0.0
    %1325 = vmatmul.mubr.f32.gmra.mrb[0].mxu0 %v1258
    %v1326 = vpop.f32.mrb[0].mxu0
    %v1327 = vadd.f32 0.0, %v1326
    %v1328 = vpop.f32.mrb[0].mxu0
    %1329 = vdwg.mxu0
    %1331 = vset.pattern.permute.xlu0 0
    %1332 = vperm.xlu0 %1331, %v1218
    %v1333 = vpop.permute.xlu0 %1332
    %1336 = vset.pattern.permute.xlu0 0
    %1337 = vperm.xlu0 %1336, %v1223
    %v1338 = vpop.permute.xlu0 %1337
    %1341 = vset.pattern.permute.xlu0 0
    %1342 = vperm.xlu0 %1341, %v1228
    %v1343 = vpop.permute.xlu0 %1342
    %1346 = vset.pattern.permute.xlu0 0
    %1347 = vperm.xlu0 %1346, %v1233
    %v1348 = vpop.permute.xlu0 %1347
    %1351 = vset.pattern.permute.xlu0 0
    %1352 = vperm.xlu0 %1351, %v1238
    %v1353 = vpop.permute.xlu0 %1352
    %1356 = vset.pattern.permute.xlu0 0
    %1357 = vperm.xlu0 %1356, %v1243
    %v1358 = vpop.permute.xlu0 %1357
    %1361 = vset.pattern.permute.xlu0 0
    %1362 = vperm.xlu0 %1361, %v1248
    %v1363 = vpop.permute.xlu0 %1362
    %1366 = vset.pattern.permute.xlu0 0
    %1367 = vperm.xlu0 %1366, %v1253
    %v1368 = vpop.permute.xlu0 %1367
    %v1370 = vlaneseq
    %v1371 = vshrl.u32 %v1370, 7
    %v1372 = vsub.s32 0, %v1371
    %v1373 = vrot.slane %v1327, %v1372
    %v1374 = vadd.f32 %v1333, %v1373
    %v1375 = vadd.f32 %v1338, %v1373
    %v1376 = vadd.f32 %v1343, %v1373
    %v1377 = vadd.f32 %v1348, %v1373
    %v1378 = vadd.f32 %v1353, %v1373
    %v1379 = vadd.f32 %v1358, %v1373
    %v1380 = vadd.f32 %v1363, %v1373
    %v1381 = vadd.f32 %v1368, %v1373
    %vm1382 = vcmp.ge.f32.partialorder %v1374, 0.0
    %vm1383 = vcmp.ge.f32.partialorder %v1375, 0.0
    %vm1384 = vcmp.ge.f32.partialorder %v1376, 0.0
    %vm1385 = vcmp.ge.f32.partialorder %v1377, 0.0
    %vm1386 = vcmp.ge.f32.partialorder %v1378, 0.0
    %vm1387 = vcmp.ge.f32.partialorder %v1379, 0.0
    %vm1388 = vcmp.ge.f32.partialorder %v1380, 0.0
    %vm1389 = vcmp.ge.f32.partialorder %v1381, 0.0
    %v1390 = vmul.f32 %v1374, 0.2
    %v1391 = vmul.f32 %v1375, 0.2
    %v1392 = vmul.f32 %v1376, 0.2
    %v1393 = vmul.f32 %v1377, 0.2
    %v1394 = vmul.f32 %v1378, 0.2
    %v1395 = vmul.f32 %v1379, 0.2
    %v1396 = vmul.f32 %v1380, 0.2
    %v1397 = vmul.f32 %v1381, 0.2
    %v1398 = vsel %vm1382, %v1374, %v1390
    %v1399 = vsel %vm1383, %v1375, %v1391
    %v1400 = vsel %vm1384, %v1376, %v1392
    %v1401 = vsel %vm1385, %v1377, %v1393
    %v1402 = vsel %vm1386, %v1378, %v1394
    %v1403 = vsel %vm1387, %v1379, %v1395
    %v1404 = vsel %vm1388, %v1380, %v1396
    %v1405 = vsel %vm1389, %v1381, %v1397
    %v1406 = vsel %vm467, %v1398, -1e+30
    %v1407 = vsel %vm468, %v1399, -1e+30
    %v1408 = vsel %vm469, %v1400, -1e+30
    %v1409 = vsel %vm470, %v1401, -1e+30
    %v1410 = vsel %vm471, %v1402, -1e+30
    %v1411 = vsel %vm472, %v1403, -1e+30
    %v1412 = vsel %vm473, %v1404, -1e+30
    %v1413 = vsel %vm474, %v1405, -1e+30
    %v1414 = vsel %vm171, %v1406, -inf
    %1415 = vmax.xlane.f32.xlu0 %v1414
    %v1416 = vpop.xlane.xlu0 %1415
    %v1417 = vsel %vm171, %v1407, -inf
    %1418 = vmax.xlane.f32.xlu0 %v1417
    %v1419 = vpop.xlane.xlu0 %1418
    %v1420 = vsel %vm171, %v1408, -inf
    %1421 = vmax.xlane.f32.xlu0 %v1420
    %v1422 = vpop.xlane.xlu0 %1421
    %v1423 = vsel %vm171, %v1409, -inf
    %1424 = vmax.xlane.f32.xlu0 %v1423
    %v1425 = vpop.xlane.xlu0 %1424
    %v1426 = vsel %vm171, %v1410, -inf
    %1427 = vmax.xlane.f32.xlu0 %v1426
    %v1428 = vpop.xlane.xlu0 %1427
    %v1429 = vsel %vm171, %v1411, -inf
    %1430 = vmax.xlane.f32.xlu0 %v1429
    %v1431 = vpop.xlane.xlu0 %1430
    %v1432 = vsel %vm171, %v1412, -inf
    %1433 = vmax.xlane.f32.xlu0 %v1432
    %v1434 = vpop.xlane.xlu0 %1433
    %v1435 = vsel %vm171, %v1413, -inf
    %1436 = vmax.xlane.f32.xlu0 %v1435
    %v1437 = vpop.xlane.xlu0 %1436
    %v1438 = vsub.f32 %v1406, %v1416
    %v1439 = vsub.f32 %v1407, %v1419
    %v1440 = vsub.f32 %v1408, %v1422
    %v1441 = vsub.f32 %v1409, %v1425
    %v1442 = vsub.f32 %v1410, %v1428
    %v1443 = vsub.f32 %v1411, %v1431
    %v1444 = vsub.f32 %v1412, %v1434
    %v1445 = vsub.f32 %v1413, %v1437
    %v1446 = vmul.f32 %v1438, 1.442695
    %v1447 = vpow.pop %v1446
    %v1448 = vmul.f32 %v1439, 1.442695
    %v1449 = vpow.pop %v1448
    %v1450 = vmul.f32 %v1440, 1.442695
    %v1451 = vpow.pop %v1450
    %v1452 = vmul.f32 %v1441, 1.442695
    %v1453 = vpow.pop %v1452
    %v1454 = vmul.f32 %v1442, 1.442695
    %v1455 = vpow.pop %v1454
    %v1456 = vmul.f32 %v1443, 1.442695
    %v1457 = vpow.pop %v1456
    %v1458 = vmul.f32 %v1444, 1.442695
    %v1459 = vpow.pop %v1458
    %v1460 = vmul.f32 %v1445, 1.442695
    %v1461 = vpow.pop %v1460
    %v1462 = vsel %vm171, %v1447, 0.0
    %1463 = vadd.xlane.f32.xlu0 %v1462
    %v1464 = vpop.xlane.xlu0 %1463
    %v1465 = vsel %vm171, %v1449, 0.0
    %1466 = vadd.xlane.f32.xlu0 %v1465
    %v1467 = vpop.xlane.xlu0 %1466
    %v1468 = vsel %vm171, %v1451, 0.0
    %1469 = vadd.xlane.f32.xlu0 %v1468
    %v1470 = vpop.xlane.xlu0 %1469
    %v1471 = vsel %vm171, %v1453, 0.0
    %1472 = vadd.xlane.f32.xlu0 %v1471
    %v1473 = vpop.xlane.xlu0 %1472
    %v1474 = vsel %vm171, %v1455, 0.0
    %1475 = vadd.xlane.f32.xlu0 %v1474
    %v1476 = vpop.xlane.xlu0 %1475
    %v1477 = vsel %vm171, %v1457, 0.0
    %1478 = vadd.xlane.f32.xlu0 %v1477
    %v1479 = vpop.xlane.xlu0 %1478
    %v1480 = vsel %vm171, %v1459, 0.0
    %1481 = vadd.xlane.f32.xlu0 %v1480
    %v1482 = vpop.xlane.xlu0 %1481
    %v1483 = vsel %vm171, %v1461, 0.0
    %1484 = vadd.xlane.f32.xlu0 %v1483
    %v1485 = vpop.xlane.xlu0 %1484
    %v1486 = vpack.c.bf16 %v1449, %v1447
    %v1487 = vpack.c.bf16 %v1453, %v1451
    %v1488 = vpack.c.bf16 %v1457, %v1455
    %v1489 = vpack.c.bf16 %v1461, %v1459
    %v1491 = vsel %vm171, %v1486, 0
    %v1494 = vsel %vm171, %v1487, 0
    %v1497 = vsel %vm171, %v1488, 0
    %v1500 = vsel %vm171, %v1489, 0
    %1502 = vmatprep.subr.bf16.mxu0 0
    %1503 = vmatpush1.bf16.msra.mxu0 %v1115
    %1504 = vmatprep.subr.bf16.mxu0 0
    %1505 = vmatpush1.bf16.msra.mxu0 %v1116
    %1506 = vmatprep.subr.bf16.mxu0 0
    %1507 = vmatpush1.bf16.msra.mxu0 %v1117
    %1508 = vmatprep.subr.bf16.mxu0 0
    %1509 = vmatpush1.bf16.msra.mxu0 %v1118
    %1510 = vmatprep.subr.bf16.mxu0 0
    %1511 = vmatpush1.bf16.msra.mxu0 0
    %1512 = vmatprep.subr.bf16.mxu0 0
    %1513 = vmatpush1.bf16.msra.mxu0 0
    %1514 = vmatprep.subr.bf16.mxu0 0
    %1515 = vmatpush1.bf16.msra.mxu0 0
    %1516 = vmatprep.subr.bf16.mxu0 0
    %1517 = vmatpush1.bf16.msra.mxu0 0
    %1518 = vmatprep.subr.bf16.mxu0 0
    %1519 = vmatpush1.bf16.msra.mxu0 0
    %1520 = vmatprep.subr.bf16.mxu0 0
    %1521 = vmatpush1.bf16.msra.mxu0 0
    %1522 = vmatprep.subr.bf16.mxu0 0
    %1523 = vmatpush1.bf16.msra.mxu0 0
    %1524 = vmatprep.subr.bf16.mxu0 0
    %1525 = vmatpush1.bf16.msra.mxu0 0
    %1526 = vmatprep.subr.bf16.mxu0 0
    %1527 = vmatpush1.bf16.msra.mxu0 0
    %1528 = vmatprep.subr.bf16.mxu0 0
    %1529 = vmatpush1.bf16.msra.mxu0 0
    %1530 = vmatprep.subr.bf16.mxu0 0
    %1531 = vmatpush1.bf16.msra.mxu0 0
    %1532 = vmatprep.subr.bf16.mxu0 0
    %1533 = vmatpush1.bf16.msra.mxu0 0
    %1534 = vmatprep.mubr.bf16.mxu0 0
    %1535 = vmatmul.mubr.bf16.gmra.mrb[0].mxu0 %v1491
    %v1536 = vpop.f32.mrb[0].mxu0
    %v1537 = vadd.f32 0.0, %v1536
    %v1538 = vpop.f32.mrb[0].mxu0
    %v1539 = vpop.f32.mrb[0].mxu0
    %v1540 = vadd.f32 0.0, %v1539
    %v1541 = vpop.f32.mrb[0].mxu0
    %1542 = vmatprep.mubr.bf16.mxu0 0
    %1543 = vmatmul.mubr.bf16.gmra.mrb[0].mxu0 %v1494
    %v1544 = vpop.f32.mrb[0].mxu0
    %v1545 = vadd.f32 0.0, %v1544
    %v1546 = vpop.f32.mrb[0].mxu0
    %v1547 = vpop.f32.mrb[0].mxu0
    %v1548 = vadd.f32 0.0, %v1547
    %v1549 = vpop.f32.mrb[0].mxu0
    %1550 = vmatprep.mubr.bf16.mxu0 0
    %1551 = vmatmul.mubr.bf16.gmra.mrb[0].mxu0 %v1497
    %v1552 = vpop.f32.mrb[0].mxu0
    %v1553 = vadd.f32 0.0, %v1552
    %v1554 = vpop.f32.mrb[0].mxu0
    %v1555 = vpop.f32.mrb[0].mxu0
    %v1556 = vadd.f32 0.0, %v1555
    %v1557 = vpop.f32.mrb[0].mxu0
    %1558 = vmatprep.mubr.bf16.mxu0 0
    %1559 = vmatmul.mubr.bf16.gmra.mrb[0].mxu0 %v1500
    %v1560 = vpop.f32.mrb[0].mxu0
    %v1561 = vadd.f32 0.0, %v1560
    %v1562 = vpop.f32.mrb[0].mxu0
    %v1563 = vpop.f32.mrb[0].mxu0
    %v1564 = vadd.f32 0.0, %v1563
    %v1565 = vpop.f32.mrb[0].mxu0
    %1566 = vdwg.mxu0
    %v1567 = vrcp.pop %v1464
    %v1568 = vrcp.pop %v1467
    %v1569 = vrcp.pop %v1470
    %v1570 = vrcp.pop %v1473
    %v1571 = vrcp.pop %v1476
    %v1572 = vrcp.pop %v1479
    %v1573 = vrcp.pop %v1482
    %v1574 = vrcp.pop %v1485
    %v1575 = vmul.f32 %v1537, %v1567
    %v1576 = vmul.f32 %v1540, %v1568
    %v1577 = vmul.f32 %v1545, %v1569
    %v1578 = vmul.f32 %v1548, %v1570
    %v1579 = vmul.f32 %v1553, %v1571
    %v1580 = vmul.f32 %v1556, %v1572
    %v1581 = vmul.f32 %v1561, %v1573
    %v1582 = vmul.f32 %v1564, %v1574
    %1583 = vset.pattern.permute.xlu0 1
    %1584 = vperm.xlu0 %1583, %v1218
    %v1585 = vpop.permute.xlu0 %1584
    %1587 = vset.pattern.permute.xlu0 1
    %1588 = vperm.xlu0 %1587, %v1223
    %v1589 = vpop.permute.xlu0 %1588
    %1591 = vset.pattern.permute.xlu0 1
    %1592 = vperm.xlu0 %1591, %v1228
    %v1593 = vpop.permute.xlu0 %1592
    %1595 = vset.pattern.permute.xlu0 1
    %1596 = vperm.xlu0 %1595, %v1233
    %v1597 = vpop.permute.xlu0 %1596
    %1599 = vset.pattern.permute.xlu0 1
    %1600 = vperm.xlu0 %1599, %v1238
    %v1601 = vpop.permute.xlu0 %1600
    %1603 = vset.pattern.permute.xlu0 1
    %1604 = vperm.xlu0 %1603, %v1243
    %v1605 = vpop.permute.xlu0 %1604
    %1607 = vset.pattern.permute.xlu0 1
    %1608 = vperm.xlu0 %1607, %v1248
    %v1609 = vpop.permute.xlu0 %1608
    %1611 = vset.pattern.permute.xlu0 1
    %1612 = vperm.xlu0 %1611, %v1253
    %v1613 = vpop.permute.xlu0 %1612
    %v1615 = vlaneseq
    %v1616 = vshrl.u32 %v1615, 7
    %v1617 = vsub.s32 1, %v1616
    %v1618 = vrot.slane %v1327, %v1617
    %v1619 = vadd.f32 %v1585, %v1618
    %v1620 = vadd.f32 %v1589, %v1618
    %v1621 = vadd.f32 %v1593, %v1618
    %v1622 = vadd.f32 %v1597, %v1618
    %v1623 = vadd.f32 %v1601, %v1618
    %v1624 = vadd.f32 %v1605, %v1618
    %v1625 = vadd.f32 %v1609, %v1618
    %v1626 = vadd.f32 %v1613, %v1618
    %vm1627 = vcmp.ge.f32.partialorder %v1619, 0.0
    %vm1628 = vcmp.ge.f32.partialorder %v1620, 0.0
    %vm1629 = vcmp.ge.f32.partialorder %v1621, 0.0
    %vm1630 = vcmp.ge.f32.partialorder %v1622, 0.0
    %vm1631 = vcmp.ge.f32.partialorder %v1623, 0.0
    %vm1632 = vcmp.ge.f32.partialorder %v1624, 0.0
    %vm1633 = vcmp.ge.f32.partialorder %v1625, 0.0
    %vm1634 = vcmp.ge.f32.partialorder %v1626, 0.0
    %v1635 = vmul.f32 %v1619, 0.2
    %v1636 = vmul.f32 %v1620, 0.2
    %v1637 = vmul.f32 %v1621, 0.2
    %v1638 = vmul.f32 %v1622, 0.2
    %v1639 = vmul.f32 %v1623, 0.2
    %v1640 = vmul.f32 %v1624, 0.2
    %v1641 = vmul.f32 %v1625, 0.2
    %v1642 = vmul.f32 %v1626, 0.2
    %v1643 = vsel %vm1627, %v1619, %v1635
    %v1644 = vsel %vm1628, %v1620, %v1636
    %v1645 = vsel %vm1629, %v1621, %v1637
    %v1646 = vsel %vm1630, %v1622, %v1638
    %v1647 = vsel %vm1631, %v1623, %v1639
    %v1648 = vsel %vm1632, %v1624, %v1640
    %v1649 = vsel %vm1633, %v1625, %v1641
    %v1650 = vsel %vm1634, %v1626, %v1642
    %v1651 = vsel %vm467, %v1643, -1e+30
    %v1652 = vsel %vm468, %v1644, -1e+30
    %v1653 = vsel %vm469, %v1645, -1e+30
    %v1654 = vsel %vm470, %v1646, -1e+30
    %v1655 = vsel %vm471, %v1647, -1e+30
    %v1656 = vsel %vm472, %v1648, -1e+30
    %v1657 = vsel %vm473, %v1649, -1e+30
    %v1658 = vsel %vm474, %v1650, -1e+30
    %v1659 = vsel %vm171, %v1651, -inf
    %1660 = vmax.xlane.f32.xlu0 %v1659
    %v1661 = vpop.xlane.xlu0 %1660
    %v1662 = vsel %vm171, %v1652, -inf
    %1663 = vmax.xlane.f32.xlu0 %v1662
    %v1664 = vpop.xlane.xlu0 %1663
    %v1665 = vsel %vm171, %v1653, -inf
    %1666 = vmax.xlane.f32.xlu0 %v1665
    %v1667 = vpop.xlane.xlu0 %1666
    %v1668 = vsel %vm171, %v1654, -inf
    %1669 = vmax.xlane.f32.xlu0 %v1668
    %v1670 = vpop.xlane.xlu0 %1669
    %v1671 = vsel %vm171, %v1655, -inf
    %1672 = vmax.xlane.f32.xlu0 %v1671
    %v1673 = vpop.xlane.xlu0 %1672
    %v1674 = vsel %vm171, %v1656, -inf
    %1675 = vmax.xlane.f32.xlu0 %v1674
    %v1676 = vpop.xlane.xlu0 %1675
    %v1677 = vsel %vm171, %v1657, -inf
    %1678 = vmax.xlane.f32.xlu0 %v1677
    %v1679 = vpop.xlane.xlu0 %1678
    %v1680 = vsel %vm171, %v1658, -inf
    %1681 = vmax.xlane.f32.xlu0 %v1680
    %v1682 = vpop.xlane.xlu0 %1681
    %v1683 = vsub.f32 %v1651, %v1661
    %v1684 = vsub.f32 %v1652, %v1664
    %v1685 = vsub.f32 %v1653, %v1667
    %v1686 = vsub.f32 %v1654, %v1670
    %v1687 = vsub.f32 %v1655, %v1673
    %v1688 = vsub.f32 %v1656, %v1676
    %v1689 = vsub.f32 %v1657, %v1679
    %v1690 = vsub.f32 %v1658, %v1682
    %v1691 = vmul.f32 %v1683, 1.442695
    %v1692 = vpow.pop %v1691
    %v1693 = vmul.f32 %v1684, 1.442695
    %v1694 = vpow.pop %v1693
    %v1695 = vmul.f32 %v1685, 1.442695
    %v1696 = vpow.pop %v1695
    %v1697 = vmul.f32 %v1686, 1.442695
    %v1698 = vpow.pop %v1697
    %v1699 = vmul.f32 %v1687, 1.442695
    %v1700 = vpow.pop %v1699
    %v1701 = vmul.f32 %v1688, 1.442695
    %v1702 = vpow.pop %v1701
    %v1703 = vmul.f32 %v1689, 1.442695
    %v1704 = vpow.pop %v1703
    %v1705 = vmul.f32 %v1690, 1.442695
    %v1706 = vpow.pop %v1705
    %v1707 = vsel %vm171, %v1692, 0.0
    %1708 = vadd.xlane.f32.xlu0 %v1707
    %v1709 = vpop.xlane.xlu0 %1708
    %v1710 = vsel %vm171, %v1694, 0.0
    %1711 = vadd.xlane.f32.xlu0 %v1710
    %v1712 = vpop.xlane.xlu0 %1711
    %v1713 = vsel %vm171, %v1696, 0.0
    %1714 = vadd.xlane.f32.xlu0 %v1713
    %v1715 = vpop.xlane.xlu0 %1714
    %v1716 = vsel %vm171, %v1698, 0.0
    %1717 = vadd.xlane.f32.xlu0 %v1716
    %v1718 = vpop.xlane.xlu0 %1717
    %v1719 = vsel %vm171, %v1700, 0.0
    %1720 = vadd.xlane.f32.xlu0 %v1719
    %v1721 = vpop.xlane.xlu0 %1720
    %v1722 = vsel %vm171, %v1702, 0.0
    %1723 = vadd.xlane.f32.xlu0 %v1722
    %v1724 = vpop.xlane.xlu0 %1723
    %v1725 = vsel %vm171, %v1704, 0.0
    %1726 = vadd.xlane.f32.xlu0 %v1725
    %v1727 = vpop.xlane.xlu0 %1726
    %v1728 = vsel %vm171, %v1706, 0.0
    %1729 = vadd.xlane.f32.xlu0 %v1728
    %v1730 = vpop.xlane.xlu0 %1729
    %v1731 = vpack.c.bf16 %v1694, %v1692
    %v1732 = vpack.c.bf16 %v1698, %v1696
    %v1733 = vpack.c.bf16 %v1702, %v1700
    %v1734 = vpack.c.bf16 %v1706, %v1704
    %1739 = vrot.lane.b32.xlu0 %v1115, 96
    %v1740 = vpop.permute.xlu0 %1739
    %1741 = vrot.lane.b32.xlu0 %v1116, 96
    %v1742 = vpop.permute.xlu0 %1741
    %1743 = vrot.lane.b32.xlu0 %v1117, 96
    %v1744 = vpop.permute.xlu0 %1743
    %1745 = vrot.lane.b32.xlu0 %v1118, 96
    %v1746 = vpop.permute.xlu0 %1745
    %v1752 = vsel %vm171, %v1731, 0
    %v1755 = vsel %vm171, %v1732, 0
    %v1758 = vsel %vm171, %v1733, 0
    %v1761 = vsel %vm171, %v1734, 0
    %1763 = vmatprep.subr.bf16.mxu0 0
    %1764 = vmatpush1.bf16.msra.mxu0 %v1740
    %1765 = vmatprep.subr.bf16.mxu0 0
    %1766 = vmatpush1.bf16.msra.mxu0 %v1742
    %1767 = vmatprep.subr.bf16.mxu0 0
    %1768 = vmatpush1.bf16.msra.mxu0 %v1744
    %1769 = vmatprep.subr.bf16.mxu0 0
    %1770 = vmatpush1.bf16.msra.mxu0 %v1746
    %1771 = vmatprep.subr.bf16.mxu0 0
    %1772 = vmatpush1.bf16.msra.mxu0 0
    %1773 = vmatprep.subr.bf16.mxu0 0
    %1774 = vmatpush1.bf16.msra.mxu0 0
    %1775 = vmatprep.subr.bf16.mxu0 0
    %1776 = vmatpush1.bf16.msra.mxu0 0
    %1777 = vmatprep.subr.bf16.mxu0 0
    %1778 = vmatpush1.bf16.msra.mxu0 0
    %1779 = vmatprep.subr.bf16.mxu0 0
    %1780 = vmatpush1.bf16.msra.mxu0 0
    %1781 = vmatprep.subr.bf16.mxu0 0
    %1782 = vmatpush1.bf16.msra.mxu0 0
    %1783 = vmatprep.subr.bf16.mxu0 0
    %1784 = vmatpush1.bf16.msra.mxu0 0
    %1785 = vmatprep.subr.bf16.mxu0 0
    %1786 = vmatpush1.bf16.msra.mxu0 0
    %1787 = vmatprep.subr.bf16.mxu0 0
    %1788 = vmatpush1.bf16.msra.mxu0 0
    %1789 = vmatprep.subr.bf16.mxu0 0
    %1790 = vmatpush1.bf16.msra.mxu0 0
    %1791 = vmatprep.subr.bf16.mxu0 0
    %1792 = vmatpush1.bf16.msra.mxu0 0
    %1793 = vmatprep.subr.bf16.mxu0 0
    %1794 = vmatpush1.bf16.msra.mxu0 0
    %1795 = vmatprep.mubr.bf16.mxu0 0
    %1796 = vmatmul.mubr.bf16.gmra.mrb[0].mxu0 %v1752
    %v1797 = vpop.f32.mrb[0].mxu0
    %v1798 = vadd.f32 0.0, %v1797
    %v1799 = vpop.f32.mrb[0].mxu0
    %v1800 = vpop.f32.mrb[0].mxu0
    %v1801 = vadd.f32 0.0, %v1800
    %v1802 = vpop.f32.mrb[0].mxu0
    %1803 = vmatprep.mubr.bf16.mxu0 0
    %1804 = vmatmul.mubr.bf16.gmra.mrb[0].mxu0 %v1755
    %v1805 = vpop.f32.mrb[0].mxu0
    %v1806 = vadd.f32 0.0, %v1805
    %v1807 = vpop.f32.mrb[0].mxu0
    %v1808 = vpop.f32.mrb[0].mxu0
    %v1809 = vadd.f32 0.0, %v1808
    %v1810 = vpop.f32.mrb[0].mxu0
    %1811 = vmatprep.mubr.bf16.mxu0 0
    %1812 = vmatmul.mubr.bf16.gmra.mrb[0].mxu0 %v1758
    %v1813 = vpop.f32.mrb[0].mxu0
    %v1814 = vadd.f32 0.0, %v1813
    %v1815 = vpop.f32.mrb[0].mxu0
    %v1816 = vpop.f32.mrb[0].mxu0
    %v1817 = vadd.f32 0.0, %v1816
    %v1818 = vpop.f32.mrb[0].mxu0
    %1819 = vmatprep.mubr.bf16.mxu0 0
    %1820 = vmatmul.mubr.bf16.gmra.mrb[0].mxu0 %v1761
    %v1821 = vpop.f32.mrb[0].mxu0
    %v1822 = vadd.f32 0.0, %v1821
    %v1823 = vpop.f32.mrb[0].mxu0
    %v1824 = vpop.f32.mrb[0].mxu0
    %v1825 = vadd.f32 0.0, %v1824
    %v1826 = vpop.f32.mrb[0].mxu0
    %1827 = vdwg.mxu0
    %v1828 = vrcp.pop %v1709
    %v1829 = vrcp.pop %v1712
    %v1830 = vrcp.pop %v1715
    %v1831 = vrcp.pop %v1718
    %v1832 = vrcp.pop %v1721
    %v1833 = vrcp.pop %v1724
    %v1834 = vrcp.pop %v1727
    %v1835 = vrcp.pop %v1730
    %v1836 = vmul.f32 %v1798, %v1828
    %v1837 = vmul.f32 %v1801, %v1829
    %v1838 = vmul.f32 %v1806, %v1830
    %v1839 = vmul.f32 %v1809, %v1831
    %v1840 = vmul.f32 %v1814, %v1832
    %v1841 = vmul.f32 %v1817, %v1833
    %v1842 = vmul.f32 %v1822, %v1834
    %v1843 = vmul.f32 %v1825, %v1835
    %1852 = vrot.lane.b32.xlu0 %v1836, 32
    %v1853 = vpop.permute.xlu0 %1852
    %1854 = vrot.lane.b32.xlu0 %v1837, 32
    %v1855 = vpop.permute.xlu0 %1854
    %1856 = vrot.lane.b32.xlu0 %v1838, 32
    %v1857 = vpop.permute.xlu0 %1856
    %1858 = vrot.lane.b32.xlu0 %v1839, 32
    %v1859 = vpop.permute.xlu0 %1858
    %1860 = vrot.lane.b32.xlu0 %v1840, 32
    %v1861 = vpop.permute.xlu0 %1860
    %1862 = vrot.lane.b32.xlu0 %v1841, 32
    %v1863 = vpop.permute.xlu0 %1862
    %1864 = vrot.lane.b32.xlu0 %v1842, 32
    %v1865 = vpop.permute.xlu0 %1864
    %1866 = vrot.lane.b32.xlu0 %v1843, 32
    %v1867 = vpop.permute.xlu0 %1866
    %v1876 = vsel %vm945, %v1575, %v1853
    %v1877 = vsel %vm945, %v1576, %v1855
    %v1878 = vsel %vm945, %v1577, %v1857
    %v1879 = vsel %vm945, %v1578, %v1859
    %v1880 = vsel %vm945, %v1579, %v1861
    %v1881 = vsel %vm945, %v1580, %v1863
    %v1882 = vsel %vm945, %v1581, %v1865
    %v1883 = vsel %vm945, %v1582, %v1867
    %v1884 = vadd.f32 %v1876, %v994
    %v1885 = vadd.f32 %v1877, %v995
    %v1886 = vadd.f32 %v1878, %v996
    %v1887 = vadd.f32 %v1879, %v997
    %v1888 = vadd.f32 %v1880, %v998
    %v1889 = vadd.f32 %v1881, %v999
    %v1890 = vadd.f32 %v1882, %v1000
    %v1891 = vadd.f32 %v1883, %v1001
    %vm1892 = vcmp.gt.f32.partialorder %v1884, 0.0
    %vm1893 = vcmp.gt.f32.partialorder %v1885, 0.0
    %vm1894 = vcmp.gt.f32.partialorder %v1886, 0.0
    %vm1895 = vcmp.gt.f32.partialorder %v1887, 0.0
    %vm1896 = vcmp.gt.f32.partialorder %v1888, 0.0
    %vm1897 = vcmp.gt.f32.partialorder %v1889, 0.0
    %vm1898 = vcmp.gt.f32.partialorder %v1890, 0.0
    %vm1899 = vcmp.gt.f32.partialorder %v1891, 0.0
    %v1900 = vmin.f32 %v1884, 0.0
    %v1901 = vmin.f32 %v1885, 0.0
    %v1902 = vmin.f32 %v1886, 0.0
    %v1903 = vmin.f32 %v1887, 0.0
    %v1904 = vmin.f32 %v1888, 0.0
    %v1905 = vmin.f32 %v1889, 0.0
    %v1906 = vmin.f32 %v1890, 0.0
    %v1907 = vmin.f32 %v1891, 0.0
    %v1908 = vmul.f32 %v1900, 1.442695
    %v1909 = vpow.pop %v1908
    %v1910 = vmul.f32 %v1901, 1.442695
    %v1911 = vpow.pop %v1910
    %v1912 = vmul.f32 %v1902, 1.442695
    %v1913 = vpow.pop %v1912
    %v1914 = vmul.f32 %v1903, 1.442695
    %v1915 = vpow.pop %v1914
    %v1916 = vmul.f32 %v1904, 1.442695
    %v1917 = vpow.pop %v1916
    %v1918 = vmul.f32 %v1905, 1.442695
    %v1919 = vpow.pop %v1918
    %v1920 = vmul.f32 %v1906, 1.442695
    %v1921 = vpow.pop %v1920
    %v1922 = vmul.f32 %v1907, 1.442695
    %v1923 = vpow.pop %v1922
    %v1924 = vsub.f32 %v1909, 1.0
    %v1925 = vsub.f32 %v1911, 1.0
    %v1926 = vsub.f32 %v1913, 1.0
    %v1927 = vsub.f32 %v1915, 1.0
    %v1928 = vsub.f32 %v1917, 1.0
    %v1929 = vsub.f32 %v1919, 1.0
    %v1930 = vsub.f32 %v1921, 1.0
    %v1931 = vsub.f32 %v1923, 1.0
    %v1932 = vsel %vm1892, %v1884, %v1924
    %v1933 = vsel %vm1893, %v1885, %v1925
    %v1934 = vsel %vm1894, %v1886, %v1926
    %v1935 = vsel %vm1895, %v1887, %v1927
    %v1936 = vsel %vm1896, %v1888, %v1928
    %v1937 = vsel %vm1897, %v1889, %v1929
    %v1938 = vsel %vm1898, %v1890, %v1930
    %v1939 = vsel %vm1899, %v1891, %v1931
    %v1940 = vpack.c.bf16 %v1933, %v1932
    %v1941 = vpack.c.bf16 %v1935, %v1934
    %v1942 = vpack.c.bf16 %v1937, %v1936
    %v1943 = vpack.c.bf16 %v1939, %v1938
    %v1944 = vld [vmem:[%s8] sm:$0xf]
    %v1945 = vld [vmem:[%s8 + $0x4] sm:$0xf]
    %v1946 = vld [vmem:[%s8 + $0x8] sm:$0xf]
    %v1947 = vld [vmem:[%s8 + $0xc] sm:$0xf]
    %v1948 = vld [vmem:[%s8 + $0x10] sm:$0xf]
    %v1949 = vld [vmem:[%s8 + $0x14] sm:$0xf]
    %v1950 = vld [vmem:[%s8 + $0x18] sm:$0xf]
    %v1951 = vld [vmem:[%s8 + $0x1c] sm:$0xf]
    %v1960 = vunpack.c.l.b16 %v1944
    %v1961 = vunpack.c.l.b16 %v1945
    %v1962 = vunpack.c.l.b16 %v1946
    %v1963 = vunpack.c.l.b16 %v1947
    %v1964 = vunpack.c.l.b16 %v1948
    %v1965 = vunpack.c.l.b16 %v1949
    %v1966 = vunpack.c.l.b16 %v1950
    %v1967 = vunpack.c.l.b16 %v1951
    %v1968 = vpack.c.b16 %v1961, %v1960
    %v1969 = vpack.c.b16 %v1963, %v1962
    %v1970 = vpack.c.b16 %v1965, %v1964
    %v1971 = vpack.c.b16 %v1967, %v1966
    %v1977 = vsel %vm171, %v1940, 0
    %v1980 = vsel %vm171, %v1941, 0
    %v1983 = vsel %vm171, %v1942, 0
    %v1986 = vsel %vm171, %v1943, 0
    %1988 = vmatprep.subr.bf16.mxu0 0
    %1989 = vmatpush1.bf16.msra.mxu0 %v1968
    %1990 = vmatprep.subr.bf16.mxu0 0
    %1991 = vmatpush1.bf16.msra.mxu0 %v1969
    %1992 = vmatprep.subr.bf16.mxu0 0
    %1993 = vmatpush1.bf16.msra.mxu0 %v1970
    %1994 = vmatprep.subr.bf16.mxu0 0
    %1995 = vmatpush1.bf16.msra.mxu0 %v1971
    %1996 = vmatprep.subr.bf16.mxu0 0
    %1997 = vmatpush1.bf16.msra.mxu0 0
    %1998 = vmatprep.subr.bf16.mxu0 0
    %1999 = vmatpush1.bf16.msra.mxu0 0
    %2000 = vmatprep.subr.bf16.mxu0 0
    %2001 = vmatpush1.bf16.msra.mxu0 0
    %2002 = vmatprep.subr.bf16.mxu0 0
    %2003 = vmatpush1.bf16.msra.mxu0 0
    %2004 = vmatprep.subr.bf16.mxu0 0
    %2005 = vmatpush1.bf16.msra.mxu0 0
    %2006 = vmatprep.subr.bf16.mxu0 0
    %2007 = vmatpush1.bf16.msra.mxu0 0
    %2008 = vmatprep.subr.bf16.mxu0 0
    %2009 = vmatpush1.bf16.msra.mxu0 0
    %2010 = vmatprep.subr.bf16.mxu0 0
    %2011 = vmatpush1.bf16.msra.mxu0 0
    %2012 = vmatprep.subr.bf16.mxu0 0
    %2013 = vmatpush1.bf16.msra.mxu0 0
    %2014 = vmatprep.subr.bf16.mxu0 0
    %2015 = vmatpush1.bf16.msra.mxu0 0
    %2016 = vmatprep.subr.bf16.mxu0 0
    %2017 = vmatpush1.bf16.msra.mxu0 0
    %2018 = vmatprep.subr.bf16.mxu0 0
    %2019 = vmatpush1.bf16.msra.mxu0 0
    %2020 = vmatprep.mubr.bf16.mxu0 0
    %2021 = vmatmul.mubr.bf16.gmra.mrb[0].mxu0 %v1977
    %v2022 = vpop.f32.mrb[0].mxu0
    %v2023 = vadd.f32 0.0, %v2022
    %v2024 = vpop.f32.mrb[0].mxu0
    %v2025 = vpop.f32.mrb[0].mxu0
    %v2026 = vadd.f32 0.0, %v2025
    %v2027 = vpop.f32.mrb[0].mxu0
    %2028 = vmatprep.mubr.bf16.mxu0 0
    %2029 = vmatmul.mubr.bf16.gmra.mrb[0].mxu0 %v1980
    %v2030 = vpop.f32.mrb[0].mxu0
    %v2031 = vadd.f32 0.0, %v2030
    %v2032 = vpop.f32.mrb[0].mxu0
    %v2033 = vpop.f32.mrb[0].mxu0
    %v2034 = vadd.f32 0.0, %v2033
    %v2035 = vpop.f32.mrb[0].mxu0
    %2036 = vmatprep.mubr.bf16.mxu0 0
    %2037 = vmatmul.mubr.bf16.gmra.mrb[0].mxu0 %v1983
    %v2038 = vpop.f32.mrb[0].mxu0
    %v2039 = vadd.f32 0.0, %v2038
    %v2040 = vpop.f32.mrb[0].mxu0
    %v2041 = vpop.f32.mrb[0].mxu0
    %v2042 = vadd.f32 0.0, %v2041
    %v2043 = vpop.f32.mrb[0].mxu0
    %2044 = vmatprep.mubr.bf16.mxu0 0
    %2045 = vmatmul.mubr.bf16.gmra.mrb[0].mxu0 %v1986
    %v2046 = vpop.f32.mrb[0].mxu0
    %v2047 = vadd.f32 0.0, %v2046
    %v2048 = vpop.f32.mrb[0].mxu0
    %v2049 = vpop.f32.mrb[0].mxu0
    %v2050 = vadd.f32 0.0, %v2049
    %v2051 = vpop.f32.mrb[0].mxu0
    %2052 = vdwg.mxu0
    %v2053 = vpack.c.bf16 %v2026, %v2023
    %v2054 = vpack.c.bf16 %v2034, %v2031
    %v2055 = vpack.c.bf16 %v2042, %v2039
    %v2056 = vpack.c.bf16 %v2050, %v2047
    %v2057 = vld [vmem:[%s10] sm:$0xff]
    %v2058 = vld [vmem:[%s10 + $0x8] sm:$0xff]
    %v2059 = vld [vmem:[%s10 + $0x10] sm:$0xff]
    %v2060 = vld [vmem:[%s10 + $0x18] sm:$0xff]
    %v2061 = vld [vmem:[%s10 + $0x20] sm:$0xff]
    %v2062 = vld [vmem:[%s10 + $0x28] sm:$0xff]
    %v2063 = vld [vmem:[%s10 + $0x30] sm:$0xff]
    %v2064 = vld [vmem:[%s10 + $0x38] sm:$0xff]
    %v2065 = vld [vmem:[%s10 + $0x40] sm:$0xff]
    %v2066 = vld [vmem:[%s10 + $0x48] sm:$0xff]
    %v2067 = vld [vmem:[%s10 + $0x50] sm:$0xff]
    %v2068 = vld [vmem:[%s10 + $0x58] sm:$0xff]
    %v2069 = vld [vmem:[%s10 + $0x60] sm:$0xff]
    %v2070 = vld [vmem:[%s10 + $0x68] sm:$0xff]
    %v2071 = vld [vmem:[%s10 + $0x70] sm:$0xff]
    %v2072 = vld [vmem:[%s10 + $0x78] sm:$0xff]
    %2073 = vmatprep.subr.mxu0 0.0
    %2074 = vmatpush1.msra.mxu0 %v2057
    %2075 = vmatprep.subr.mxu0 0.0
    %2076 = vmatpush1.msra.mxu0 %v2058
    %2077 = vmatprep.subr.mxu0 0.0
    %2078 = vmatpush1.msra.mxu0 %v2059
    %2079 = vmatprep.subr.mxu0 0.0
    %2080 = vmatpush1.msra.mxu0 %v2060
    %2081 = vmatprep.subr.mxu0 0.0
    %2082 = vmatpush1.msra.mxu0 %v2061
    %2083 = vmatprep.subr.mxu0 0.0
    %2084 = vmatpush1.msra.mxu0 %v2062
    %2085 = vmatprep.subr.mxu0 0.0
    %2086 = vmatpush1.msra.mxu0 %v2063
    %2087 = vmatprep.subr.mxu0 0.0
    %2088 = vmatpush1.msra.mxu0 %v2064
    %2089 = vmatprep.subr.mxu0 0.0
    %2090 = vmatpush1.msra.mxu0 %v2065
    %2091 = vmatprep.subr.mxu0 0.0
    %2092 = vmatpush1.msra.mxu0 %v2066
    %2093 = vmatprep.subr.mxu0 0.0
    %2094 = vmatpush1.msra.mxu0 %v2067
    %2095 = vmatprep.subr.mxu0 0.0
    %2096 = vmatpush1.msra.mxu0 %v2068
    %2097 = vmatprep.subr.mxu0 0.0
    %2098 = vmatpush1.msra.mxu0 %v2069
    %2099 = vmatprep.subr.mxu0 0.0
    %2100 = vmatpush1.msra.mxu0 %v2070
    %2101 = vmatprep.subr.mxu0 0.0
    %2102 = vmatpush1.msra.mxu0 %v2071
    %2103 = vmatprep.subr.mxu0 0.0
    %2104 = vmatpush1.msra.mxu0 %v2072
    %2105 = vmatprep.subr.mxu0 0.0
    %2106 = vmatpush1.msra.mxu0 0.0
    %2107 = vmatprep.subr.mxu0 0.0
    %2108 = vmatpush1.msra.mxu0 0.0
    %2109 = vmatprep.subr.mxu0 0.0
    %2110 = vmatpush1.msra.mxu0 0.0
    %2111 = vmatprep.subr.mxu0 0.0
    %2112 = vmatpush1.msra.mxu0 0.0
    %2113 = vmatprep.subr.mxu0 0.0
    %2114 = vmatpush1.msra.mxu0 0.0
    %2115 = vmatprep.subr.mxu0 0.0
    %2116 = vmatpush1.msra.mxu0 0.0
    %2117 = vmatprep.subr.mxu0 0.0
    %2118 = vmatpush1.msra.mxu0 0.0
    %2119 = vmatprep.subr.mxu0 0.0
    %2120 = vmatpush1.msra.mxu0 0.0
    %2121 = vmatprep.subr.mxu0 0.0
    %2122 = vmatpush1.msra.mxu0 0.0
    %2123 = vmatprep.subr.mxu0 0.0
    %2124 = vmatpush1.msra.mxu0 0.0
    %2125 = vmatprep.subr.mxu0 0.0
    %2126 = vmatpush1.msra.mxu0 0.0
    %2127 = vmatprep.subr.mxu0 0.0
    %2128 = vmatpush1.msra.mxu0 0.0
    %2129 = vmatprep.subr.mxu0 0.0
    %2130 = vmatpush1.msra.mxu0 0.0
    %2131 = vmatprep.subr.mxu0 0.0
    %2132 = vmatpush1.msra.mxu0 0.0
    %2133 = vmatprep.subr.mxu0 0.0
    %2134 = vmatpush1.msra.mxu0 0.0
    %2135 = vmatprep.subr.mxu0 0.0
    %2136 = vmatpush1.msra.mxu0 0.0
    %2137 = vmatprep.mubr.f32.mxu0 0.0
    %2138 = vmatmul.mubr.f32.gmra.mrb[0].mxu0 %v2023
    %v2139 = vpop.f32.mrb[0].mxu0
    %v2140 = vadd.f32 0.0, %v2139
    %v2141 = vpop.f32.mrb[0].mxu0
    %2142 = vmatprep.mubr.f32.mxu0 0.0
    %2143 = vmatmul.mubr.f32.gmra.mrb[0].mxu0 %v2026
    %v2144 = vpop.f32.mrb[0].mxu0
    %v2145 = vadd.f32 0.0, %v2144
    %v2146 = vpop.f32.mrb[0].mxu0
    %2147 = vmatprep.mubr.f32.mxu0 0.0
    %2148 = vmatmul.mubr.f32.gmra.mrb[0].mxu0 %v2031
    %v2149 = vpop.f32.mrb[0].mxu0
    %v2150 = vadd.f32 0.0, %v2149
    %v2151 = vpop.f32.mrb[0].mxu0
    %2152 = vmatprep.mubr.f32.mxu0 0.0
    %2153 = vmatmul.mubr.f32.gmra.mrb[0].mxu0 %v2034
    %v2154 = vpop.f32.mrb[0].mxu0
    %v2155 = vadd.f32 0.0, %v2154
    %v2156 = vpop.f32.mrb[0].mxu0
    %2157 = vmatprep.mubr.f32.mxu0 0.0
    %2158 = vmatmul.mubr.f32.gmra.mrb[0].mxu0 %v2039
    %v2159 = vpop.f32.mrb[0].mxu0
    %v2160 = vadd.f32 0.0, %v2159
    %v2161 = vpop.f32.mrb[0].mxu0
    %2162 = vmatprep.mubr.f32.mxu0 0.0
    %2163 = vmatmul.mubr.f32.gmra.mrb[0].mxu0 %v2042
    %v2164 = vpop.f32.mrb[0].mxu0
    %v2165 = vadd.f32 0.0, %v2164
    %v2166 = vpop.f32.mrb[0].mxu0
    %2167 = vmatprep.mubr.f32.mxu0 0.0
    %2168 = vmatmul.mubr.f32.gmra.mrb[0].mxu0 %v2047
    %v2169 = vpop.f32.mrb[0].mxu0
    %v2170 = vadd.f32 0.0, %v2169
    %v2171 = vpop.f32.mrb[0].mxu0
    %2172 = vmatprep.mubr.f32.mxu0 0.0
    %2173 = vmatmul.mubr.f32.gmra.mrb[0].mxu0 %v2050
    %v2174 = vpop.f32.mrb[0].mxu0
    %v2175 = vadd.f32 0.0, %v2174
    %v2176 = vpop.f32.mrb[0].mxu0
    %2177 = vdwg.mxu0
    %v2178 = vld [vmem:[%s9] sm:$0x1]
    %2179 = vmatprep.subr.mxu0 0.0
    %2180 = vmatpush1.xpose.msra.mxu0 %v2023
    %2181 = vmatprep.subr.mxu0 0.0
    %2182 = vmatpush1.xpose.msra.mxu0 %v2026
    %2183 = vmatprep.subr.mxu0 0.0
    %2184 = vmatpush1.xpose.msra.mxu0 %v2031
    %2185 = vmatprep.subr.mxu0 0.0
    %2186 = vmatpush1.xpose.msra.mxu0 %v2034
    %2187 = vmatprep.subr.mxu0 0.0
    %2188 = vmatpush1.xpose.msra.mxu0 %v2039
    %2189 = vmatprep.subr.mxu0 0.0
    %2190 = vmatpush1.xpose.msra.mxu0 %v2042
    %2191 = vmatprep.subr.mxu0 0.0
    %2192 = vmatpush1.xpose.msra.mxu0 %v2047
    %2193 = vmatprep.subr.mxu0 0.0
    %2194 = vmatpush1.xpose.msra.mxu0 %v2050
    %2195 = vmatprep.subr.mxu0 0.0
    %2196 = vmatpush1.xpose.msra.mxu0 0.0
    %2197 = vmatprep.subr.mxu0 0.0
    %2198 = vmatpush1.xpose.msra.mxu0 0.0
    %2199 = vmatprep.subr.mxu0 0.0
    %2200 = vmatpush1.xpose.msra.mxu0 0.0
    %2201 = vmatprep.subr.mxu0 0.0
    %2202 = vmatpush1.xpose.msra.mxu0 0.0
    %2203 = vmatprep.subr.mxu0 0.0
    %2204 = vmatpush1.xpose.msra.mxu0 0.0
    %2205 = vmatprep.subr.mxu0 0.0
    %2206 = vmatpush1.xpose.msra.mxu0 0.0
    %2207 = vmatprep.subr.mxu0 0.0
    %2208 = vmatpush1.xpose.msra.mxu0 0.0
    %2209 = vmatprep.subr.mxu0 0.0
    %2210 = vmatpush1.xpose.msra.mxu0 0.0
    %2211 = vmatprep.subr.mxu0 0.0
    %2212 = vmatpush1.xpose.msra.mxu0 0.0
    %2213 = vmatprep.subr.mxu0 0.0
    %2214 = vmatpush1.xpose.msra.mxu0 0.0
    %2215 = vmatprep.subr.mxu0 0.0
    %2216 = vmatpush1.xpose.msra.mxu0 0.0
    %2217 = vmatprep.subr.mxu0 0.0
    %2218 = vmatpush1.xpose.msra.mxu0 0.0
    %2219 = vmatprep.subr.mxu0 0.0
    %2220 = vmatpush1.xpose.msra.mxu0 0.0
    %2221 = vmatprep.subr.mxu0 0.0
    %2222 = vmatpush1.xpose.msra.mxu0 0.0
    %2223 = vmatprep.subr.mxu0 0.0
    %2224 = vmatpush1.xpose.msra.mxu0 0.0
    %2225 = vmatprep.subr.mxu0 0.0
    %2226 = vmatpush1.xpose.msra.mxu0 0.0
    %2227 = vmatprep.subr.mxu0 0.0
    %2228 = vmatpush1.xpose.msra.mxu0 0.0
    %2229 = vmatprep.subr.mxu0 0.0
    %2230 = vmatpush1.xpose.msra.mxu0 0.0
    %2231 = vmatprep.subr.mxu0 0.0
    %2232 = vmatpush1.xpose.msra.mxu0 0.0
    %2233 = vmatprep.subr.mxu0 0.0
    %2234 = vmatpush1.xpose.msra.mxu0 0.0
    %2235 = vmatprep.subr.mxu0 0.0
    %2236 = vmatpush1.xpose.msra.mxu0 0.0
    %2237 = vmatprep.subr.mxu0 0.0
    %2238 = vmatpush1.xpose.msra.mxu0 0.0
    %2239 = vmatprep.subr.mxu0 0.0
    %2240 = vmatpush1.xpose.msra.mxu0 0.0
    %2241 = vmatprep.subr.mxu0 0.0
    %2242 = vmatpush1.xpose.msra.mxu0 0.0
    %2243 = vmatprep.mubr.f32.mxu0 0.0
    %2244 = vmatmul.mubr.f32.gmra.mrb[0].mxu0 %v2178
    %v2245 = vpop.f32.mrb[0].mxu0
    %v2246 = vadd.f32 0.0, %v2245
    %v2247 = vpop.f32.mrb[0].mxu0
    %2248 = vdwg.mxu0
    %2250 = vset.pattern.permute.xlu0 0
    %2251 = vperm.xlu0 %2250, %v2140
    %v2252 = vpop.permute.xlu0 %2251
    %2255 = vset.pattern.permute.xlu0 0
    %2256 = vperm.xlu0 %2255, %v2145
    %v2257 = vpop.permute.xlu0 %2256
    %2260 = vset.pattern.permute.xlu0 0
    %2261 = vperm.xlu0 %2260, %v2150
    %v2262 = vpop.permute.xlu0 %2261
    %2265 = vset.pattern.permute.xlu0 0
    %2266 = vperm.xlu0 %2265, %v2155
    %v2267 = vpop.permute.xlu0 %2266
    %2270 = vset.pattern.permute.xlu0 0
    %2271 = vperm.xlu0 %2270, %v2160
    %v2272 = vpop.permute.xlu0 %2271
    %2275 = vset.pattern.permute.xlu0 0
    %2276 = vperm.xlu0 %2275, %v2165
    %v2277 = vpop.permute.xlu0 %2276
    %2280 = vset.pattern.permute.xlu0 0
    %2281 = vperm.xlu0 %2280, %v2170
    %v2282 = vpop.permute.xlu0 %2281
    %2285 = vset.pattern.permute.xlu0 0
    %2286 = vperm.xlu0 %2285, %v2175
    %v2287 = vpop.permute.xlu0 %2286
    %v2289 = vlaneseq
    %v2290 = vshrl.u32 %v2289, 7
    %v2291 = vsub.s32 0, %v2290
    %v2292 = vrot.slane %v2246, %v2291
    %v2293 = vadd.f32 %v2252, %v2292
    %v2294 = vadd.f32 %v2257, %v2292
    %v2295 = vadd.f32 %v2262, %v2292
    %v2296 = vadd.f32 %v2267, %v2292
    %v2297 = vadd.f32 %v2272, %v2292
    %v2298 = vadd.f32 %v2277, %v2292
    %v2299 = vadd.f32 %v2282, %v2292
    %v2300 = vadd.f32 %v2287, %v2292
    %vm2301 = vcmp.ge.f32.partialorder %v2293, 0.0
    %vm2302 = vcmp.ge.f32.partialorder %v2294, 0.0
    %vm2303 = vcmp.ge.f32.partialorder %v2295, 0.0
    %vm2304 = vcmp.ge.f32.partialorder %v2296, 0.0
    %vm2305 = vcmp.ge.f32.partialorder %v2297, 0.0
    %vm2306 = vcmp.ge.f32.partialorder %v2298, 0.0
    %vm2307 = vcmp.ge.f32.partialorder %v2299, 0.0
    %vm2308 = vcmp.ge.f32.partialorder %v2300, 0.0
    %v2309 = vmul.f32 %v2293, 0.2
    %v2310 = vmul.f32 %v2294, 0.2
    %v2311 = vmul.f32 %v2295, 0.2
    %v2312 = vmul.f32 %v2296, 0.2
    %v2313 = vmul.f32 %v2297, 0.2
    %v2314 = vmul.f32 %v2298, 0.2
    %v2315 = vmul.f32 %v2299, 0.2
    %v2316 = vmul.f32 %v2300, 0.2
    %v2317 = vsel %vm2301, %v2293, %v2309
    %v2318 = vsel %vm2302, %v2294, %v2310
    %v2319 = vsel %vm2303, %v2295, %v2311
    %v2320 = vsel %vm2304, %v2296, %v2312
    %v2321 = vsel %vm2305, %v2297, %v2313
    %v2322 = vsel %vm2306, %v2298, %v2314
    %v2323 = vsel %vm2307, %v2299, %v2315
    %v2324 = vsel %vm2308, %v2300, %v2316
    %v2325 = vsel %vm467, %v2317, -1e+30
    %v2326 = vsel %vm468, %v2318, -1e+30
    %v2327 = vsel %vm469, %v2319, -1e+30
    %v2328 = vsel %vm470, %v2320, -1e+30
    %v2329 = vsel %vm471, %v2321, -1e+30
    %v2330 = vsel %vm472, %v2322, -1e+30
    %v2331 = vsel %vm473, %v2323, -1e+30
    %v2332 = vsel %vm474, %v2324, -1e+30
    %v2333 = vsel %vm171, %v2325, -inf
    %2334 = vmax.xlane.f32.xlu0 %v2333
    %v2335 = vpop.xlane.xlu0 %2334
    %v2336 = vsel %vm171, %v2326, -inf
    %2337 = vmax.xlane.f32.xlu0 %v2336
    %v2338 = vpop.xlane.xlu0 %2337
    %v2339 = vsel %vm171, %v2327, -inf
    %2340 = vmax.xlane.f32.xlu0 %v2339
    %v2341 = vpop.xlane.xlu0 %2340
    %v2342 = vsel %vm171, %v2328, -inf
    %2343 = vmax.xlane.f32.xlu0 %v2342
    %v2344 = vpop.xlane.xlu0 %2343
    %v2345 = vsel %vm171, %v2329, -inf
    %2346 = vmax.xlane.f32.xlu0 %v2345
    %v2347 = vpop.xlane.xlu0 %2346
    %v2348 = vsel %vm171, %v2330, -inf
    %2349 = vmax.xlane.f32.xlu0 %v2348
    %v2350 = vpop.xlane.xlu0 %2349
    %v2351 = vsel %vm171, %v2331, -inf
    %2352 = vmax.xlane.f32.xlu0 %v2351
    %v2353 = vpop.xlane.xlu0 %2352
    %v2354 = vsel %vm171, %v2332, -inf
    %2355 = vmax.xlane.f32.xlu0 %v2354
    %v2356 = vpop.xlane.xlu0 %2355
    %v2357 = vsub.f32 %v2325, %v2335
    %v2358 = vsub.f32 %v2326, %v2338
    %v2359 = vsub.f32 %v2327, %v2341
    %v2360 = vsub.f32 %v2328, %v2344
    %v2361 = vsub.f32 %v2329, %v2347
    %v2362 = vsub.f32 %v2330, %v2350
    %v2363 = vsub.f32 %v2331, %v2353
    %v2364 = vsub.f32 %v2332, %v2356
    %v2365 = vmul.f32 %v2357, 1.442695
    %v2366 = vpow.pop %v2365
    %v2367 = vmul.f32 %v2358, 1.442695
    %v2368 = vpow.pop %v2367
    %v2369 = vmul.f32 %v2359, 1.442695
    %v2370 = vpow.pop %v2369
    %v2371 = vmul.f32 %v2360, 1.442695
    %v2372 = vpow.pop %v2371
    %v2373 = vmul.f32 %v2361, 1.442695
    %v2374 = vpow.pop %v2373
    %v2375 = vmul.f32 %v2362, 1.442695
    %v2376 = vpow.pop %v2375
    %v2377 = vmul.f32 %v2363, 1.442695
    %v2378 = vpow.pop %v2377
    %v2379 = vmul.f32 %v2364, 1.442695
    %v2380 = vpow.pop %v2379
    %v2381 = vsel %vm171, %v2366, 0.0
    %2382 = vadd.xlane.f32.xlu0 %v2381
    %v2383 = vpop.xlane.xlu0 %2382
    %v2384 = vsel %vm171, %v2368, 0.0
    %2385 = vadd.xlane.f32.xlu0 %v2384
    %v2386 = vpop.xlane.xlu0 %2385
    %v2387 = vsel %vm171, %v2370, 0.0
    %2388 = vadd.xlane.f32.xlu0 %v2387
    %v2389 = vpop.xlane.xlu0 %2388
    %v2390 = vsel %vm171, %v2372, 0.0
    %2391 = vadd.xlane.f32.xlu0 %v2390
    %v2392 = vpop.xlane.xlu0 %2391
    %v2393 = vsel %vm171, %v2374, 0.0
    %2394 = vadd.xlane.f32.xlu0 %v2393
    %v2395 = vpop.xlane.xlu0 %2394
    %v2396 = vsel %vm171, %v2376, 0.0
    %2397 = vadd.xlane.f32.xlu0 %v2396
    %v2398 = vpop.xlane.xlu0 %2397
    %v2399 = vsel %vm171, %v2378, 0.0
    %2400 = vadd.xlane.f32.xlu0 %v2399
    %v2401 = vpop.xlane.xlu0 %2400
    %v2402 = vsel %vm171, %v2380, 0.0
    %2403 = vadd.xlane.f32.xlu0 %v2402
    %v2404 = vpop.xlane.xlu0 %2403
    %v2405 = vpack.c.bf16 %v2368, %v2366
    %v2406 = vpack.c.bf16 %v2372, %v2370
    %v2407 = vpack.c.bf16 %v2376, %v2374
    %v2408 = vpack.c.bf16 %v2380, %v2378
    %v2410 = vsel %vm171, %v2405, 0
    %v2413 = vsel %vm171, %v2406, 0
    %v2416 = vsel %vm171, %v2407, 0
    %v2419 = vsel %vm171, %v2408, 0
    %2421 = vmatprep.subr.bf16.mxu0 0
    %2422 = vmatpush1.bf16.msra.mxu0 %v2053
    %2423 = vmatprep.subr.bf16.mxu0 0
    %2424 = vmatpush1.bf16.msra.mxu0 %v2054
    %2425 = vmatprep.subr.bf16.mxu0 0
    %2426 = vmatpush1.bf16.msra.mxu0 %v2055
    %2427 = vmatprep.subr.bf16.mxu0 0
    %2428 = vmatpush1.bf16.msra.mxu0 %v2056
    %2429 = vmatprep.subr.bf16.mxu0 0
    %2430 = vmatpush1.bf16.msra.mxu0 0
    %2431 = vmatprep.subr.bf16.mxu0 0
    %2432 = vmatpush1.bf16.msra.mxu0 0
    %2433 = vmatprep.subr.bf16.mxu0 0
    %2434 = vmatpush1.bf16.msra.mxu0 0
    %2435 = vmatprep.subr.bf16.mxu0 0
    %2436 = vmatpush1.bf16.msra.mxu0 0
    %2437 = vmatprep.subr.bf16.mxu0 0
    %2438 = vmatpush1.bf16.msra.mxu0 0
    %2439 = vmatprep.subr.bf16.mxu0 0
    %2440 = vmatpush1.bf16.msra.mxu0 0
    %2441 = vmatprep.subr.bf16.mxu0 0
    %2442 = vmatpush1.bf16.msra.mxu0 0
    %2443 = vmatprep.subr.bf16.mxu0 0
    %2444 = vmatpush1.bf16.msra.mxu0 0
    %2445 = vmatprep.subr.bf16.mxu0 0
    %2446 = vmatpush1.bf16.msra.mxu0 0
    %2447 = vmatprep.subr.bf16.mxu0 0
    %2448 = vmatpush1.bf16.msra.mxu0 0
    %2449 = vmatprep.subr.bf16.mxu0 0
    %2450 = vmatpush1.bf16.msra.mxu0 0
    %2451 = vmatprep.subr.bf16.mxu0 0
    %2452 = vmatpush1.bf16.msra.mxu0 0
    %2453 = vmatprep.mubr.bf16.mxu0 0
    %2454 = vmatmul.mubr.bf16.gmra.mrb[0].mxu0 %v2410
    %v2455 = vpop.f32.mrb[0].mxu0
    %v2456 = vadd.f32 0.0, %v2455
    %v2457 = vpop.f32.mrb[0].mxu0
    %v2458 = vpop.f32.mrb[0].mxu0
    %v2459 = vadd.f32 0.0, %v2458
    %v2460 = vpop.f32.mrb[0].mxu0
    %2461 = vmatprep.mubr.bf16.mxu0 0
    %2462 = vmatmul.mubr.bf16.gmra.mrb[0].mxu0 %v2413
    %v2463 = vpop.f32.mrb[0].mxu0
    %v2464 = vadd.f32 0.0, %v2463
    %v2465 = vpop.f32.mrb[0].mxu0
    %v2466 = vpop.f32.mrb[0].mxu0
    %v2467 = vadd.f32 0.0, %v2466
    %v2468 = vpop.f32.mrb[0].mxu0
    %2469 = vmatprep.mubr.bf16.mxu0 0
    %2470 = vmatmul.mubr.bf16.gmra.mrb[0].mxu0 %v2416
    %v2471 = vpop.f32.mrb[0].mxu0
    %v2472 = vadd.f32 0.0, %v2471
    %v2473 = vpop.f32.mrb[0].mxu0
    %v2474 = vpop.f32.mrb[0].mxu0
    %v2475 = vadd.f32 0.0, %v2474
    %v2476 = vpop.f32.mrb[0].mxu0
    %2477 = vmatprep.mubr.bf16.mxu0 0
    %2478 = vmatmul.mubr.bf16.gmra.mrb[0].mxu0 %v2419
    %v2479 = vpop.f32.mrb[0].mxu0
    %v2480 = vadd.f32 0.0, %v2479
    %v2481 = vpop.f32.mrb[0].mxu0
    %v2482 = vpop.f32.mrb[0].mxu0
    %v2483 = vadd.f32 0.0, %v2482
    %v2484 = vpop.f32.mrb[0].mxu0
    %2485 = vdwg.mxu0
    %v2486 = vrcp.pop %v2383
    %v2487 = vrcp.pop %v2386
    %v2488 = vrcp.pop %v2389
    %v2489 = vrcp.pop %v2392
    %v2490 = vrcp.pop %v2395
    %v2491 = vrcp.pop %v2398
    %v2492 = vrcp.pop %v2401
    %v2493 = vrcp.pop %v2404
    %v2494 = vmul.f32 %v2456, %v2486
    %v2495 = vmul.f32 %v2459, %v2487
    %v2496 = vmul.f32 %v2464, %v2488
    %v2497 = vmul.f32 %v2467, %v2489
    %v2498 = vmul.f32 %v2472, %v2490
    %v2499 = vmul.f32 %v2475, %v2491
    %v2500 = vmul.f32 %v2480, %v2492
    %v2501 = vmul.f32 %v2483, %v2493
    %v2502 = vld [vmem:[%s11] sm:$0xf]
    %v2503 = vld [vmem:[%s11 + $0x4] sm:$0xf]
    %v2504 = vld [vmem:[%s11 + $0x8] sm:$0xf]
    %v2505 = vld [vmem:[%s11 + $0xc] sm:$0xf]
    %v2506 = vld [vmem:[%s11 + $0x10] sm:$0xf]
    %v2507 = vld [vmem:[%s11 + $0x14] sm:$0xf]
    %v2508 = vld [vmem:[%s11 + $0x18] sm:$0xf]
    %v2509 = vld [vmem:[%s11 + $0x1c] sm:$0xf]
    %v2518 = vunpack.c.l.b16 %v2502
    %v2519 = vunpack.c.l.b16 %v2503
    %v2520 = vunpack.c.l.b16 %v2504
    %v2521 = vunpack.c.l.b16 %v2505
    %v2522 = vunpack.c.l.b16 %v2506
    %v2523 = vunpack.c.l.b16 %v2507
    %v2524 = vunpack.c.l.b16 %v2508
    %v2525 = vunpack.c.l.b16 %v2509
    %v2526 = vpack.c.b16 %v2519, %v2518
    %v2527 = vpack.c.b16 %v2521, %v2520
    %v2528 = vpack.c.b16 %v2523, %v2522
    %v2529 = vpack.c.b16 %v2525, %v2524
    %2534 = vmatprep.subr.bf16.mxu0 0
    %2535 = vmatpush1.bf16.msra.mxu0 %v2526
    %2536 = vmatprep.subr.bf16.mxu0 0
    %2537 = vmatpush1.bf16.msra.mxu0 %v2527
    %2538 = vmatprep.subr.bf16.mxu0 0
    %2539 = vmatpush1.bf16.msra.mxu0 %v2528
    %2540 = vmatprep.subr.bf16.mxu0 0
    %2541 = vmatpush1.bf16.msra.mxu0 %v2529
    %2542 = vmatprep.subr.bf16.mxu0 0
    %2543 = vmatpush1.bf16.msra.mxu0 0
    %2544 = vmatprep.subr.bf16.mxu0 0
    %2545 = vmatpush1.bf16.msra.mxu0 0
    %2546 = vmatprep.subr.bf16.mxu0 0
    %2547 = vmatpush1.bf16.msra.mxu0 0
    %2548 = vmatprep.subr.bf16.mxu0 0
    %2549 = vmatpush1.bf16.msra.mxu0 0
    %2550 = vmatprep.subr.bf16.mxu0 0
    %2551 = vmatpush1.bf16.msra.mxu0 0
    %2552 = vmatprep.subr.bf16.mxu0 0
    %2553 = vmatpush1.bf16.msra.mxu0 0
    %2554 = vmatprep.subr.bf16.mxu0 0
    %2555 = vmatpush1.bf16.msra.mxu0 0
    %2556 = vmatprep.subr.bf16.mxu0 0
    %2557 = vmatpush1.bf16.msra.mxu0 0
    %2558 = vmatprep.subr.bf16.mxu0 0
    %2559 = vmatpush1.bf16.msra.mxu0 0
    %2560 = vmatprep.subr.bf16.mxu0 0
    %2561 = vmatpush1.bf16.msra.mxu0 0
    %2562 = vmatprep.subr.bf16.mxu0 0
    %2563 = vmatpush1.bf16.msra.mxu0 0
    %2564 = vmatprep.subr.bf16.mxu0 0
    %2565 = vmatpush1.bf16.msra.mxu0 0
    %2566 = vmatprep.mubr.bf16.mxu0 0
    %2567 = vmatmul.mubr.bf16.gmra.mrb[0].mxu0 %v1977
    %v2568 = vpop.f32.mrb[0].mxu0
    %v2569 = vadd.f32 0.0, %v2568
    %v2570 = vpop.f32.mrb[0].mxu0
    %v2571 = vpop.f32.mrb[0].mxu0
    %v2572 = vadd.f32 0.0, %v2571
    %v2573 = vpop.f32.mrb[0].mxu0
    %2574 = vmatprep.mubr.bf16.mxu0 0
    %2575 = vmatmul.mubr.bf16.gmra.mrb[0].mxu0 %v1980
    %v2576 = vpop.f32.mrb[0].mxu0
    %v2577 = vadd.f32 0.0, %v2576
    %v2578 = vpop.f32.mrb[0].mxu0
    %v2579 = vpop.f32.mrb[0].mxu0
    %v2580 = vadd.f32 0.0, %v2579
    %v2581 = vpop.f32.mrb[0].mxu0
    %2582 = vmatprep.mubr.bf16.mxu0 0
    %2583 = vmatmul.mubr.bf16.gmra.mrb[0].mxu0 %v1983
    %v2584 = vpop.f32.mrb[0].mxu0
    %v2585 = vadd.f32 0.0, %v2584
    %v2586 = vpop.f32.mrb[0].mxu0
    %v2587 = vpop.f32.mrb[0].mxu0
    %v2588 = vadd.f32 0.0, %v2587
    %v2589 = vpop.f32.mrb[0].mxu0
    %2590 = vmatprep.mubr.bf16.mxu0 0
    %2591 = vmatmul.mubr.bf16.gmra.mrb[0].mxu0 %v1986
    %v2592 = vpop.f32.mrb[0].mxu0
    %v2593 = vadd.f32 0.0, %v2592
    %v2594 = vpop.f32.mrb[0].mxu0
    %v2595 = vpop.f32.mrb[0].mxu0
    %v2596 = vadd.f32 0.0, %v2595
    %v2597 = vpop.f32.mrb[0].mxu0
    %2598 = vdwg.mxu0
    %v2599 = vadd.f32 %v2494, %v2569
    %v2600 = vadd.f32 %v2495, %v2572
    %v2601 = vadd.f32 %v2496, %v2577
    %v2602 = vadd.f32 %v2497, %v2580
    %v2603 = vadd.f32 %v2498, %v2585
    %v2604 = vadd.f32 %v2499, %v2588
    %v2605 = vadd.f32 %v2500, %v2593
    %v2606 = vadd.f32 %v2501, %v2596
    %2607 = vst [vmem:[#allocation2] sm:$0xff] %v2599
    %2608 = vst [vmem:[#allocation2 + $0x8] sm:$0xff] %v2600
    %2609 = vst [vmem:[#allocation2 + $0x10] sm:$0xff] %v2601
    %2610 = vst [vmem:[#allocation2 + $0x18] sm:$0xff] %v2602
    %2611 = vst [vmem:[#allocation2 + $0x20] sm:$0xff] %v2603
    %2612 = vst [vmem:[#allocation2 + $0x28] sm:$0xff] %v2604
    %2613 = vst [vmem:[#allocation2 + $0x30] sm:$0xff] %v2605
    %2614 = vst [vmem:[#allocation2 + $0x38] sm:$0xff] %v2606
    // Predicated region
    $region50: #{tpu_custom_call.1} parent=1 // pred_check
      _
    $region51: #{tpu_custom_call.1} parent=1 // pred_check_branch
      %2616 = sbr.rel (0) target = $region53
    $region52: #{tpu_custom_call.1} parent=1 // pred_region
      %s2618 = ssub.s32 1024, 1024
      %2619 = vsyncadd [#allocation3], %s2618
      %s2620 = sshll.u32 [#allocation2], 4
      %s2621 = int_to_ptr.vmem [resolvable:$true] %s2620
      %2626 = dma.vmem_to_hbm [thread:$0]  %s2621, 1024, %s12, [#allocation3], 128, 128, 8
    $region53: #{tpu_custom_call.1} parent=1 // pred_fallthru
      _
    // Predicated region
    $region54: #{tpu_custom_call.1} parent=1 // pred_check
      _
    $region55: #{tpu_custom_call.1} parent=1 // pred_check_branch
      %2628 = sbr.rel (0) target = $region57
    $region56: #{tpu_custom_call.1} parent=1 // pred_region
      %2629 = dma.done [#allocation3], 1024
    $region57: #{tpu_custom_call.1} parent=1 // pred_fallthru
      _
    %2630 = vsyncpa [#allocation3], 1

</llo_original>
